<compile_context>
chip_gen: v7x
topology: tpu7x:2x2x1
jax: 0.10.0
libtpu: 0.0.40
codegen_flags: <defaults>
</compile_context>

<pallas_src>
import functools

import jax
import jax.numpy as jnp
from jax.experimental import pallas as pl
from jax.experimental.pallas import tpu as pltpu

_LANE = 128


def _round_up(x, m):
    return (x + m - 1) // m * m


def _chip_flavor():
    """Coarse chip detection from device_kind.

    Returns (has_bf16_valu, two_tensor_cores).  Conservative defaults (f32
    elementwise, single TC) if the device kind is unrecognized.
    """
    try:
        kind = jax.devices()[0].device_kind.lower()
    except Exception:  # pragma: no cover - e.g. no devices visible at trace time
        kind = ""
    is_v7 = ("v7" in kind) or ("tpu7" in kind) or ("7x" in kind)
    is_v6 = "v6" in kind
    has_bf16_valu = is_v6 or is_v7          # v5e and older: no bf16 VPU path
    two_tensor_cores = is_v7                # v7x: 2 TensorCores share 'parallel' axes
    return has_bf16_valu, two_tensor_cores


def _pick_batch_tile(batch, two_tensor_cores):
    if two_tensor_cores:
        # v7x: even grid, ideally >=2 grid steps per TensorCore so each core's
        # x-tile DMA / writeback pipelines behind compute.
        if batch >= 1024:
            return 256
        if batch >= 256:
            return 128
        return _round_up(max(batch, 8), 16)
    # Single-TC (v5e/v6e, 128 MiB VMEM): bigger tiles amortize the ~0.35us
    # per-step overhead; keep >=2 grid steps when the batch allows.
    if batch >= 1024:
        return 512
    if batch >= 512:
        return 256
    if batch >= 256:
        return 128
    return _round_up(max(batch, 8), 16)


def _autoencoder_kernel(x_ref,
                        w1, b1, w2, b2, w3, b3,   # encoder params (bf16 W, f32 b)
                        w4, b4, w5, b5, w6, b6,   # decoder params
                        o_ref, *, act_dtype):
    """All six layers fused; intermediates stay in VMEM/vregs for this tile."""

    def dense(h, w_ref, b_ref):
        # bf16 MXU operands, f32 accumulation; bias added to the f32
        # accumulator (single cast to act_dtype happens at the call site).
        acc = jnp.dot(h.astype(jnp.bfloat16), w_ref[...],
                      preferred_element_type=jnp.float32)
        return acc + b_ref[...]

    def lrelu(a):
        # mul+max (2 VALU ops/elem) instead of cmp+select+mul (3).
        return jnp.maximum(a, a * 0.2)

    h = x_ref[...].astype(act_dtype)

    # ----- encoder -----
    h = lrelu(dense(h, w1, b1).astype(act_dtype))
    # Dropout(0.3) -> identity at inference
    h = lrelu(dense(h, w2, b2).astype(act_dtype))
    z = dense(h, w3, b3).astype(act_dtype)          # bottleneck, lane-padded to 128

    # ----- decoder -----
    h = lrelu(dense(z, w4, b4).astype(act_dtype))
    # Dropout(0.3) -> identity at inference
    h = lrelu(dense(h, w5, b5).astype(act_dtype))
    y = dense(h, w6, b6)                            # keep the f32 accumulator

    o_ref[...] = y.astype(o_ref.dtype)


def prepare_params(params, input_dim, encoding_dim):
    """One-time parameter prep (hoisted out of the per-call forward path).

    Zero-pads feature dims to multiples of 128 lanes and casts weights to
    bf16.  Padding is mathematically exact: padded input columns are zero,
    padded bottleneck columns get zero weights+bias (so stay zero), padded
    decoder rows are zero, and padded output columns are zero and sliced off.
    """
    d_in_p = _round_up(input_dim, _LANE)
    d_enc_p = _round_up(encoding_dim, _LANE)

    (W1, b1), (W2, b2), (W3, b3), (W4, b4), (W5, b5), (W6, b6) = params

    def pad_w(W, rows, cols):
        out = jnp.zeros((rows, cols), jnp.float32)
        return out.at[:W.shape[0], :W.shape[1]].set(W.astype(jnp.float32))

    def pad_b(b, n):
        return jnp.zeros((n,), jnp.float32).at[:b.shape[0]].set(b.astype(jnp.float32))

    padded = [
        (pad_w(W1, d_in_p, 256), pad_b(b1, 256)),
        (pad_w(W2, 256, 128), pad_b(b2, 128)),
        (pad_w(W3, 128, d_enc_p), pad_b(b3, d_enc_p)),
        (pad_w(W4, d_enc_p, 128), pad_b(b4, 128)),
        (pad_w(W5, 128, 256), pad_b(b5, 256)),
        (pad_w(W6, 256, d_in_p), pad_b(b6, d_in_p)),
    ]
    flat = []
    for W, b in padded:
        flat.append(jnp.asarray(W, jnp.bfloat16))                 # bf16 MXU operands
        flat.append(jnp.asarray(b, jnp.float32).reshape(1, -1))   # f32 bias rows
    flat = tuple(jax.device_put(p) for p in flat)                 # materialize once

    return dict(flat_params=flat, input_dim=input_dim, encoding_dim=encoding_dim,
                d_in_p=d_in_p, d_enc_p=d_enc_p)


def autoencoder_forward(x, prepared, *, batch_tile=None, out_dtype=None):
    """x: (B, D_in).  `prepared` comes from prepare_params() (called once)."""
    B, D_in = x.shape
    assert D_in == prepared["input_dim"], "input_dim mismatch vs prepared params"
    d_in_p = prepared["d_in_p"]
    d_enc_p = prepared["d_enc_p"]
    flat_params = prepared["flat_params"]
    out_dtype = out_dtype or x.dtype        # caller may request bf16 I/O to halve HBM traffic

    has_bf16_valu, two_tc = _chip_flavor()
    act_dtype = jnp.bfloat16 if has_bf16_valu else jnp.float32

    if batch_tile is None:
        batch_tile = _pick_batch_tile(B, two_tc)
    batch_tile = _round_up(batch_tile, 16)      # f32(8) + bf16(16) sublane packing
    B_pad = _round_up(B, batch_tile)

    # Zero-copy path when both the batch and the feature dim are already aligned.
    x_p = x
    if (B_pad, d_in_p) != (B, D_in):
        # TODO(synk): a masked final tile could avoid this copy for ragged B.
        x_p = jnp.zeros((B_pad, d_in_p), x.dtype).at[:B, :D_in].set(x)

    grid = (B_pad // batch_tile,)

    in_specs = [pl.BlockSpec((batch_tile, d_in_p), lambda i: (i, 0))]   # x tile
    for p in flat_params:
        # Grid-invariant index_map: Pallas elides re-DMA after the first step.
        in_specs.append(pl.BlockSpec(p.shape, lambda i: (0, 0)))

    # Lane-dense output: full (128-padded) feature axis -> unmasked vst.
    out_spec = pl.BlockSpec((batch_tile, d_in_p), lambda i: (i, 0))

    # Advisory cost estimate so XLA schedules the surrounding graph well.
    flops = int(4 * B_pad * (d_in_p * 256 + 256 * 128 + 128 * d_enc_p))
    bytes_accessed = int(
        B_pad * d_in_p * (x_p.dtype.itemsize + jnp.dtype(out_dtype).itemsize)
        + sum(int(p.size) * p.dtype.itemsize for p in flat_params))
    cost = pl.CostEstimate(flops=flops, transcendentals=0,
                           bytes_accessed=bytes_accessed)

    kernel = functools.partial(_autoencoder_kernel, act_dtype=act_dtype)

    out = pl.pallas_call(
        kernel,
        out_shape=jax.ShapeDtypeStruct((B_pad, d_in_p), out_dtype),
        grid_spec=pltpu.PrefetchScalarGridSpec(
            num_scalar_prefetch=0,
            grid=grid,
            in_specs=in_specs,
            out_specs=out_spec,
        ),
        compiler_params=pltpu.CompilerParams(
            dimension_semantics=("parallel",),
            # Actual footprint is <4 MiB for typical dims; 16 MiB leaves
            # headroom for double-buffered x/out tiles while staying well
            # inside v7x's 64 MiB per-TC VMEM.
            vmem_limit_bytes=16 * 1024 * 1024,
        ),
        cost_estimate=cost,
    )(x_p, *flat_params)

    if (B_pad, d_in_p) != (B, D_in):
        out = out[:B, :D_in]
    return out


def init_params(key, input_dim, encoding_dim):
    """Deterministic init; weights as (in, out), biases as (out,)."""
    dims = [(input_dim, 256), (256, 128), (128, encoding_dim),     # encoder
            (encoding_dim, 128), (128, 256), (256, input_dim)]     # decoder
    params = []
    for (d_in, d_out) in dims:
        key, kw, kb = jax.random.split(key, 3)
        bound = 1.0 / jnp.sqrt(d_in)
        W = jax.random.uniform(kw, (d_in, d_out), jnp.float32, -bound, bound)
        b = jax.random.uniform(kb, (d_out,), jnp.float32, -bound, bound)
        params.append((W, b))
    return params


def reference_forward_matched(x, params, act_dtype):
    """Pure-JAX reference mirroring the kernel's bf16-MXU / act_dtype-elementwise math."""
    def dense(h, W, b):
        acc = jnp.dot(h.astype(jnp.bfloat16), W.astype(jnp.bfloat16),
                      preferred_element_type=jnp.float32)
        return acc + b.astype(jnp.float32)

    def lrelu(a):
        return jnp.maximum(a, a * 0.2)

    (W1, b1), (W2, b2), (W3, b3), (W4, b4), (W5, b5), (W6, b6) = params
    h = x.astype(act_dtype)
    h = lrelu(dense(h, W1, b1).astype(act_dtype))
    h = lrelu(dense(h, W2, b2).astype(act_dtype))
    z = dense(h, W3, b3).astype(act_dtype)
    h = lrelu(dense(z, W4, b4).astype(act_dtype))
    h = lrelu(dense(h, W5, b5).astype(act_dtype))
    return dense(h, W6, b6)


def reference_forward_f32(x, params):
    """Pure-f32 reference matching the PyTorch module (eval mode)."""
    def dense(h, W, b):
        return h @ W + b

    def lrelu(a):
        return jnp.where(a > 0, a, 0.2 * a)

    (W1, b1), (W2, b2), (W3, b3), (W4, b4), (W5, b5), (W6, b6) = params
    h = lrelu(dense(x.astype(jnp.float32), W1, b1))
    h = lrelu(dense(h, W2, b2))
    z = dense(h, W3, b3)
    h = lrelu(dense(z, W4, b4))
    h = lrelu(dense(h, W5, b5))
    return dense(h, W6, b6)


if __name__ == "__main__":
    input_dim = 128
    encoding_dim = 32
    batch = 256       # aligned -> zero-copy wrapper path; grid of 2 x 128-row tiles

    key = jax.random.PRNGKey(0)
    key, kx = jax.random.split(key)
    x = jax.random.normal(kx, (batch, input_dim), jnp.float32)
    params = init_params(key, input_dim, encoding_dim)

    prepared = prepare_params(params, input_dim, encoding_dim)   # one-time, hoisted
    out = jax.block_until_ready(autoencoder_forward(x, prepared))

    has_bf16_valu, _ = _chip_flavor()
    act_dtype = jnp.bfloat16 if has_bf16_valu else jnp.float32
    ref_matched = reference_forward_matched(x, params, act_dtype)
    ref_f32 = reference_forward_f32(x, params)

    assert out.shape == (batch, input_dim)
    assert jnp.allclose(out, ref_matched, atol=1e-2, rtol=1e-2), \
        "mismatch vs matched (bf16-MXU) reference"
    assert jnp.allclose(out, ref_f32, atol=1e-1, rtol=1e-1), \
        "mismatch vs pure-f32 reference"

    print("KERNEL_OK")
</pallas_src>

<mosaic_0001>
module attributes {stable_mosaic.version = 11 : i64} {
  func.func @_autoencoder_kernel(%arg0: i32, %arg1: memref<128x128xf32, #tpu.memory_space<vmem>>, %arg2: memref<128x256xbf16, #tpu.memory_space<vmem>>, %arg3: memref<1x256xf32, #tpu.memory_space<vmem>>, %arg4: memref<256x128xbf16, #tpu.memory_space<vmem>>, %arg5: memref<1x128xf32, #tpu.memory_space<vmem>>, %arg6: memref<128x128xbf16, #tpu.memory_space<vmem>>, %arg7: memref<1x128xf32, #tpu.memory_space<vmem>>, %arg8: memref<128x128xbf16, #tpu.memory_space<vmem>>, %arg9: memref<1x128xf32, #tpu.memory_space<vmem>>, %arg10: memref<128x256xbf16, #tpu.memory_space<vmem>>, %arg11: memref<1x256xf32, #tpu.memory_space<vmem>>, %arg12: memref<256x128xbf16, #tpu.memory_space<vmem>>, %arg13: memref<1x128xf32, #tpu.memory_space<vmem>>, %arg14: memref<128x128xf32, #tpu.memory_space<vmem>>) attributes {dimension_semantics = [#tpu.dimension_semantics<parallel>], iteration_bounds = array<i64: 2>, scalar_prefetch = 0 : i64, scratch_operands = 0 : i64, tpu.core_type = #tpu.core_type<tc>, window_params = [{transform_indices = @transform_0, window_bounds = array<i64: 128, 128>}, {pipeline_mode = #tpu.pipeline_mode<synchronous>, transform_indices = @transform_1, window_bounds = array<i64: 128, 256>}, {pipeline_mode = #tpu.pipeline_mode<synchronous>, transform_indices = @transform_2, window_bounds = array<i64: 1, 256>}, {pipeline_mode = #tpu.pipeline_mode<synchronous>, transform_indices = @transform_3, window_bounds = array<i64: 256, 128>}, {pipeline_mode = #tpu.pipeline_mode<synchronous>, transform_indices = @transform_4, window_bounds = array<i64: 1, 128>}, {pipeline_mode = #tpu.pipeline_mode<synchronous>, transform_indices = @transform_5, window_bounds = array<i64: 128, 128>}, {pipeline_mode = #tpu.pipeline_mode<synchronous>, transform_indices = @transform_6, window_bounds = array<i64: 1, 128>}, {pipeline_mode = #tpu.pipeline_mode<synchronous>, transform_indices = @transform_7, window_bounds = array<i64: 128, 128>}, {pipeline_mode = #tpu.pipeline_mode<synchronous>, transform_indices = @transform_8, window_bounds = array<i64: 1, 128>}, {pipeline_mode = #tpu.pipeline_mode<synchronous>, transform_indices = @transform_9, window_bounds = array<i64: 128, 256>}, {pipeline_mode = #tpu.pipeline_mode<synchronous>, transform_indices = @transform_10, window_bounds = array<i64: 1, 256>}, {pipeline_mode = #tpu.pipeline_mode<synchronous>, transform_indices = @transform_11, window_bounds = array<i64: 256, 128>}, {pipeline_mode = #tpu.pipeline_mode<synchronous>, transform_indices = @transform_12, window_bounds = array<i64: 1, 128>}, {transform_indices = @transform_13, window_bounds = array<i64: 128, 128>}]} {
    %c0 = arith.constant 0 : index
    %c0_0 = arith.constant 0 : index
    %0 = vector.load %arg1[%c0, %c0_0] : memref<128x128xf32, #tpu.memory_space<vmem>>, vector<128x128xf32>
    %1 = arith.truncf %0 : vector<128x128xf32> to vector<128x128xbf16>
    %c0_1 = arith.constant 0 : index
    %c0_2 = arith.constant 0 : index
    %2 = vector.load %arg2[%c0_1, %c0_2] : memref<128x256xbf16, #tpu.memory_space<vmem>>, vector<128x256xbf16>
    %cst = arith.constant dense<0.000000e+00> : vector<128x256xf32>
    %3 = tpu.matmul %1, %2, %cst {dimension_numbers = #tpu.dot_dimension_numbers<[1], [0], [0], [1], [0, 0, 1, 1], [], []>} : vector<128x128xbf16>, vector<128x256xbf16>, vector<128x256xf32> -> vector<128x256xf32>
    %c0_3 = arith.constant 0 : index
    %c0_4 = arith.constant 0 : index
    %4 = vector.load %arg3[%c0_3, %c0_4] : memref<1x256xf32, #tpu.memory_space<vmem>>, vector<1x256xf32>
    %5 = vector.broadcast %4 : vector<1x256xf32> to vector<128x256xf32>
    %6 = arith.addf %3, %5 : vector<128x256xf32>
    %cst_5 = arith.constant 2.000000e-01 : f32
    %7 = vector.broadcast %cst_5 : f32 to vector<128x256xf32>
    %8 = arith.mulf %6, %7 : vector<128x256xf32>
    %9 = arith.maximumf %6, %8 : vector<128x256xf32>
    %10 = arith.truncf %9 : vector<128x256xf32> to vector<128x256xbf16>
    %c0_6 = arith.constant 0 : index
    %c0_7 = arith.constant 0 : index
    %11 = vector.load %arg4[%c0_6, %c0_7] : memref<256x128xbf16, #tpu.memory_space<vmem>>, vector<256x128xbf16>
    %cst_8 = arith.constant dense<0.000000e+00> : vector<128x128xf32>
    %12 = tpu.matmul %10, %11, %cst_8 {dimension_numbers = #tpu.dot_dimension_numbers<[1], [0], [0], [1], [0, 0, 1, 1], [], []>} : vector<128x256xbf16>, vector<256x128xbf16>, vector<128x128xf32> -> vector<128x128xf32>
    %c0_9 = arith.constant 0 : index
    %c0_10 = arith.constant 0 : index
    %13 = vector.load %arg5[%c0_9, %c0_10] : memref<1x128xf32, #tpu.memory_space<vmem>>, vector<1x128xf32>
    %14 = vector.broadcast %13 : vector<1x128xf32> to vector<128x128xf32>
    %15 = arith.addf %12, %14 : vector<128x128xf32>
    %cst_11 = arith.constant 2.000000e-01 : f32
    %16 = vector.broadcast %cst_11 : f32 to vector<128x128xf32>
    %17 = arith.mulf %15, %16 : vector<128x128xf32>
    %18 = arith.maximumf %15, %17 : vector<128x128xf32>
    %19 = arith.truncf %18 : vector<128x128xf32> to vector<128x128xbf16>
    %c0_12 = arith.constant 0 : index
    %c0_13 = arith.constant 0 : index
    %20 = vector.load %arg6[%c0_12, %c0_13] : memref<128x128xbf16, #tpu.memory_space<vmem>>, vector<128x128xbf16>
    %cst_14 = arith.constant dense<0.000000e+00> : vector<128x128xf32>
    %21 = tpu.matmul %19, %20, %cst_14 {dimension_numbers = #tpu.dot_dimension_numbers<[1], [0], [0], [1], [0, 0, 1, 1], [], []>} : vector<128x128xbf16>, vector<128x128xbf16>, vector<128x128xf32> -> vector<128x128xf32>
    %c0_15 = arith.constant 0 : index
    %c0_16 = arith.constant 0 : index
    %22 = vector.load %arg7[%c0_15, %c0_16] : memref<1x128xf32, #tpu.memory_space<vmem>>, vector<1x128xf32>
    %23 = vector.broadcast %22 : vector<1x128xf32> to vector<128x128xf32>
    %24 = arith.addf %21, %23 : vector<128x128xf32>
    %25 = arith.truncf %24 : vector<128x128xf32> to vector<128x128xbf16>
    %c0_17 = arith.constant 0 : index
    %c0_18 = arith.constant 0 : index
    %26 = vector.load %arg8[%c0_17, %c0_18] : memref<128x128xbf16, #tpu.memory_space<vmem>>, vector<128x128xbf16>
    %cst_19 = arith.constant dense<0.000000e+00> : vector<128x128xf32>
    %27 = tpu.matmul %25, %26, %cst_19 {dimension_numbers = #tpu.dot_dimension_numbers<[1], [0], [0], [1], [0, 0, 1, 1], [], []>} : vector<128x128xbf16>, vector<128x128xbf16>, vector<128x128xf32> -> vector<128x128xf32>
    %c0_20 = arith.constant 0 : index
    %c0_21 = arith.constant 0 : index
    %28 = vector.load %arg9[%c0_20, %c0_21] : memref<1x128xf32, #tpu.memory_space<vmem>>, vector<1x128xf32>
    %29 = vector.broadcast %28 : vector<1x128xf32> to vector<128x128xf32>
    %30 = arith.addf %27, %29 : vector<128x128xf32>
    %cst_22 = arith.constant 2.000000e-01 : f32
    %31 = vector.broadcast %cst_22 : f32 to vector<128x128xf32>
    %32 = arith.mulf %30, %31 : vector<128x128xf32>
    %33 = arith.maximumf %30, %32 : vector<128x128xf32>
    %34 = arith.truncf %33 : vector<128x128xf32> to vector<128x128xbf16>
    %c0_23 = arith.constant 0 : index
    %c0_24 = arith.constant 0 : index
    %35 = vector.load %arg10[%c0_23, %c0_24] : memref<128x256xbf16, #tpu.memory_space<vmem>>, vector<128x256xbf16>
    %cst_25 = arith.constant dense<0.000000e+00> : vector<128x256xf32>
    %36 = tpu.matmul %34, %35, %cst_25 {dimension_numbers = #tpu.dot_dimension_numbers<[1], [0], [0], [1], [0, 0, 1, 1], [], []>} : vector<128x128xbf16>, vector<128x256xbf16>, vector<128x256xf32> -> vector<128x256xf32>
    %c0_26 = arith.constant 0 : index
    %c0_27 = arith.constant 0 : index
    %37 = vector.load %arg11[%c0_26, %c0_27] : memref<1x256xf32, #tpu.memory_space<vmem>>, vector<1x256xf32>
    %38 = vector.broadcast %37 : vector<1x256xf32> to vector<128x256xf32>
    %39 = arith.addf %36, %38 : vector<128x256xf32>
    %cst_28 = arith.constant 2.000000e-01 : f32
    %40 = vector.broadcast %cst_28 : f32 to vector<128x256xf32>
    %41 = arith.mulf %39, %40 : vector<128x256xf32>
    %42 = arith.maximumf %39, %41 : vector<128x256xf32>
    %43 = arith.truncf %42 : vector<128x256xf32> to vector<128x256xbf16>
    %c0_29 = arith.constant 0 : index
    %c0_30 = arith.constant 0 : index
    %44 = vector.load %arg12[%c0_29, %c0_30] : memref<256x128xbf16, #tpu.memory_space<vmem>>, vector<256x128xbf16>
    %cst_31 = arith.constant dense<0.000000e+00> : vector<128x128xf32>
    %45 = tpu.matmul %43, %44, %cst_31 {dimension_numbers = #tpu.dot_dimension_numbers<[1], [0], [0], [1], [0, 0, 1, 1], [], []>} : vector<128x256xbf16>, vector<256x128xbf16>, vector<128x128xf32> -> vector<128x128xf32>
    %c0_32 = arith.constant 0 : index
    %c0_33 = arith.constant 0 : index
    %46 = vector.load %arg13[%c0_32, %c0_33] : memref<1x128xf32, #tpu.memory_space<vmem>>, vector<1x128xf32>
    %47 = vector.broadcast %46 : vector<1x128xf32> to vector<128x128xf32>
    %48 = arith.addf %45, %47 : vector<128x128xf32>
    %c0_34 = arith.constant 0 : index
    %c0_35 = arith.constant 0 : index
    %49 = vector.load %arg14[%c0_34, %c0_35] : memref<128x128xf32, #tpu.memory_space<vmem>>, vector<128x128xf32>
    tpu.vector_store %arg14[%c0_34, %c0_35], %48 {strides = array<i32>} : memref<128x128xf32, #tpu.memory_space<vmem>>, vector<128x128xf32>,
    return
  }
  func.func @transform_0(%arg0: i32) -> (i32, i32) {
    %c0_i32 = arith.constant 0 : i32
    %c0_i32_0 = arith.constant 0 : i32
    return %arg0, %c0_i32 : i32, i32
  }
  func.func @transform_1(%arg0: i32) -> (i32, i32) {
    %c0_i32 = arith.constant 0 : i32
    %c0_i32_0 = arith.constant 0 : i32
    %c0_i32_1 = arith.constant 0 : i32
    return %c0_i32, %c0_i32_0 : i32, i32
  }
  func.func @transform_2(%arg0: i32) -> (i32, i32) {
    %c0_i32 = arith.constant 0 : i32
    %c0_i32_0 = arith.constant 0 : i32
    %c0_i32_1 = arith.constant 0 : i32
    return %c0_i32, %c0_i32_0 : i32, i32
  }
  func.func @transform_3(%arg0: i32) -> (i32, i32) {
    %c0_i32 = arith.constant 0 : i32
    %c0_i32_0 = arith.constant 0 : i32
    %c0_i32_1 = arith.constant 0 : i32
    return %c0_i32, %c0_i32_0 : i32, i32
  }
  func.func @transform_4(%arg0: i32) -> (i32, i32) {
    %c0_i32 = arith.constant 0 : i32
    %c0_i32_0 = arith.constant 0 : i32
    %c0_i32_1 = arith.constant 0 : i32
    return %c0_i32, %c0_i32_0 : i32, i32
  }
  func.func @transform_5(%arg0: i32) -> (i32, i32) {
    %c0_i32 = arith.constant 0 : i32
    %c0_i32_0 = arith.constant 0 : i32
    %c0_i32_1 = arith.constant 0 : i32
    return %c0_i32, %c0_i32_0 : i32, i32
  }
  func.func @transform_6(%arg0: i32) -> (i32, i32) {
    %c0_i32 = arith.constant 0 : i32
    %c0_i32_0 = arith.constant 0 : i32
    %c0_i32_1 = arith.constant 0 : i32
    return %c0_i32, %c0_i32_0 : i32, i32
  }
  func.func @transform_7(%arg0: i32) -> (i32, i32) {
    %c0_i32 = arith.constant 0 : i32
    %c0_i32_0 = arith.constant 0 : i32
    %c0_i32_1 = arith.constant 0 : i32
    return %c0_i32, %c0_i32_0 : i32, i32
  }
  func.func @transform_8(%arg0: i32) -> (i32, i32) {
    %c0_i32 = arith.constant 0 : i32
    %c0_i32_0 = arith.constant 0 : i32
    %c0_i32_1 = arith.constant 0 : i32
    return %c0_i32, %c0_i32_0 : i32, i32
  }
  func.func @transform_9(%arg0: i32) -> (i32, i32) {
    %c0_i32 = arith.constant 0 : i32
    %c0_i32_0 = arith.constant 0 : i32
    %c0_i32_1 = arith.constant 0 : i32
    return %c0_i32, %c0_i32_0 : i32, i32
  }
  func.func @transform_10(%arg0: i32) -> (i32, i32) {
    %c0_i32 = arith.constant 0 : i32
    %c0_i32_0 = arith.constant 0 : i32
    %c0_i32_1 = arith.constant 0 : i32
    return %c0_i32, %c0_i32_0 : i32, i32
  }
  func.func @transform_11(%arg0: i32) -> (i32, i32) {
    %c0_i32 = arith.constant 0 : i32
    %c0_i32_0 = arith.constant 0 : i32
    %c0_i32_1 = arith.constant 0 : i32
    return %c0_i32, %c0_i32_0 : i32, i32
  }
  func.func @transform_12(%arg0: i32) -> (i32, i32) {
    %c0_i32 = arith.constant 0 : i32
    %c0_i32_0 = arith.constant 0 : i32
    %c0_i32_1 = arith.constant 0 : i32
    return %c0_i32, %c0_i32_0 : i32, i32
  }
  func.func @transform_13(%arg0: i32) -> (i32, i32) {
    %c0_i32 = arith.constant 0 : i32
    %c0_i32_0 = arith.constant 0 : i32
    return %arg0, %c0_i32 : i32, i32
  }
}

</mosaic_0001>

<llo_original>
// kernel: tpu_custom_call.1
$region0: #{tpu_custom_call.1}
  #allocation0 [shape = 'u32[]', space=smem, size = 0x4, offset = 0x4, fixed_abs, tag = 'smem constant byte address 0x4 - core index']
  #allocation1 [shape = 'u32[144,128]{1,0:T(1,128)}', space=vmem, size = 0x12000, scoped, tag = 'internal scratch']
  %s0 = inlined_call_operand.hbm [shape: f32[256,128], index: 0, kind: input, shape index: {}]
  %s1 = inlined_call_operand.hbm [shape: bf16[128,256], index: 1, kind: input, shape index: {}]
  %s2 = inlined_call_operand.vmem [shape: f32[1,256], index: 2, kind: input, shape index: {}]
  %s3 = inlined_call_operand.hbm [shape: bf16[256,128], index: 3, kind: input, shape index: {}]
  %s4 = inlined_call_operand.vmem [shape: f32[1,128], index: 4, kind: input, shape index: {}]
  %s5 = inlined_call_operand.hbm [shape: bf16[128,128], index: 5, kind: input, shape index: {}]
  %s6 = inlined_call_operand.vmem [shape: f32[1,128], index: 6, kind: input, shape index: {}]
  %s7 = inlined_call_operand.hbm [shape: bf16[128,128], index: 7, kind: input, shape index: {}]
  %s8 = inlined_call_operand.vmem [shape: f32[1,128], index: 8, kind: input, shape index: {}]
  %s9 = inlined_call_operand.hbm [shape: bf16[128,256], index: 9, kind: input, shape index: {}]
  %s10 = inlined_call_operand.vmem [shape: f32[1,256], index: 10, kind: input, shape index: {}]
  %s11 = inlined_call_operand.hbm [shape: bf16[256,128], index: 11, kind: input, shape index: {}]
  %s12 = inlined_call_operand.vmem [shape: f32[1,128], index: 12, kind: input, shape index: {}]
  %s13 = inlined_call_operand.hbm [shape: f32[256,128], index: 13, kind: output, shape index: {}]
  %s14 = sld [smem:[#allocation0]]
  $region113: #{tpu_custom_call.1} parent=0
    _
  %s16 = ssub.s32 1, %s14
  %s17 = scalar_select 0, %s16, %s14
  $region1: #{tpu_custom_call.1} parent=0
    #allocation2 [shape = 'u8[131072]{0}', space=vmem, size = 0x20000, scoped, tag = 'input window, operand 0']
    #allocation3 [shape = 's32[2]{0}', space=sflag, size = 0x8, scoped, tag = 'scoped memory for tpu_custom_call.1']
    #allocation4 [shape = 's32[2]{0}', space=sflag, size = 0x8, scoped, tag = 'scoped memory for tpu_custom_call.1']
    #allocation5 [shape = 'u8[65536]{0}', space=vmem, size = 0x10000, scoped, tag = 'input window, operand 1, single buffered']
    #allocation6 [shape = 's32[1]{0}', space=sflag, size = 0x4, scoped, tag = 'scoped memory for tpu_custom_call.1']
    #allocation7 [shape = 'u8[65536]{0}', space=vmem, size = 0x10000, scoped, tag = 'input window, operand 3, single buffered']
    #allocation8 [shape = 'u8[32768]{0}', space=vmem, size = 0x8000, scoped, tag = 'input window, operand 5, single buffered']
    #allocation9 [shape = 's32[1]{0}', space=sflag, size = 0x4, scoped, tag = 'scoped memory for tpu_custom_call.1']
    #allocation10 [shape = 'u8[32768]{0}', space=vmem, size = 0x8000, scoped, tag = 'input window, operand 7, single buffered']
    #allocation11 [shape = 'u8[65536]{0}', space=vmem, size = 0x10000, scoped, tag = 'input window, operand 9, single buffered']
    #allocation12 [shape = 's32[1]{0}', space=sflag, size = 0x4, scoped, tag = 'scoped memory for tpu_custom_call.1']
    #allocation13 [shape = 'u8[65536]{0}', space=vmem, size = 0x10000, scoped, tag = 'input window, operand 11, single buffered']
    #allocation14 [shape = 'u8[131072]{0}', space=vmem, size = 0x20000, scoped, tag = 'output window, operand 0']
    %18 = vsyncpa [#allocation3], 0
    %s19 = scalar_lea.sflag [#allocation3], 1
    %20 = vsyncpa %s19, 0
    %21 = vsyncpa [#allocation6], 0
    %22 = vsyncpa [#allocation9], 0
    %23 = vsyncpa [#allocation12], 0
    %24 = vsyncpa [#allocation4], 0
    %s25 = scalar_lea.sflag [#allocation4], 1
    %26 = vsyncpa %s25, 0
    loop: start=0, step=1, limit=4
    $region2: #{tpu_custom_call.1} parent=1 // loop_pre_header
      _
    $region3: #{tpu_custom_call.1} parent=1 // loop_header
      %s28 = sphi 0, %s32
      %p29 = scmp.ge.s32.totalorder %s28, 4
      %s38 = sphi 0, %s40
      %s41 = sphi 0, %s38
      %s42 = sphi 0, %s41
      %s58 = sphi 0, %s42
      %s62 = sphi 0, %s62
      %s64 = sphi 0, %s62
      %s65 = sphi 0, %s64
      %s79 = sphi 0, %s65
      %s83 = sphi 0, %s83
      %s85 = sphi 0, %s83
      %s86 = sphi 0, %s85
      %s100 = sphi 0, %s86
      %s104 = sphi 0, %s104
      %s106 = sphi 0, %s104
      %s107 = sphi 0, %s106
      %s121 = sphi 0, %s107
      %s125 = sphi 0, %s125
      %s127 = sphi 0, %s125
      %s128 = sphi 0, %s127
      %s142 = sphi 0, %s128
      %s146 = sphi 0, %s146
      %s148 = sphi 0, %s146
      %s149 = sphi 0, %s148
      %s163 = sphi 0, %s149
      %s167 = sphi 0, %s167
      %s169 = sphi 0, %s167
      %s170 = sphi 0, %s169
      %s184 = sphi 0, %s170
      %s188 = sphi 0, %s188
      %s190 = sphi 0, %s188
      %s191 = sphi 0, %s190
      %s205 = sphi 0, %s191
      %s209 = sphi 0, %s209
      %s211 = sphi 0, %s209
      %s212 = sphi 0, %s211
      %s226 = sphi 0, %s212
      %s230 = sphi 0, %s230
      %s232 = sphi 0, %s230
      %s233 = sphi 0, %s232
      %s247 = sphi 0, %s233
      %s251 = sphi 0, %s251
      %s253 = sphi 0, %s251
      %s254 = sphi 0, %s253
      %s268 = sphi 0, %s254
      %s272 = sphi 0, %s272
      %s274 = sphi 0, %s272
      %s275 = sphi 0, %s274
      %s289 = sphi 0, %s275
      %s293 = sphi 0, %s293
      %s295 = sphi 0, %s293
      %s296 = sphi 0, %s295
      %s310 = sphi 0, %s296
      %s316 = sphi 0, %s318
      %s319 = sphi 0, %s316
      %s320 = sphi 0, %s319
      %s336 = sphi 0, %s320
    $region4: #{tpu_custom_call.1} parent=1 // loop_header_branch
      %31 = sbr.rel (%p29) target = $region8
    $region5: #{tpu_custom_call.1} parent=1 // loop_body
      %s33 = ssub.s32 %s28, 1
      %s34 = ssub.s32 %s28, 2
      %s35 = sadd.s32 %s28, 1
      %s36 = ssub.s32 %s28, %s35
      %p37 = scmp.eq.s32.totalorder %s36, 0
      %s39 = sadd.s32 %s38, 1
      %s40 = scalar_select %p37, %s38, %s39
      %p43 = pneg %p37
      %p44 = scmp.eq.s32.totalorder %s28, 1
      %p45 = por %p43, %p44
      %p46 = scmp.ne.s32.totalorder %s38, %s41
      %p47 = scmp.eq.s32.totalorder %s28, 0
      %p48 = por %p46, %p47
      %p49 = scmp.ne.s32.totalorder %s38, %s41
      %p50 = scmp.eq.s32.totalorder %s33, 1
      %p51 = por %p49, %p50
      %p52 = scmp.ne.s32.totalorder %s41, %s42
      %p53 = scmp.eq.s32.totalorder %s33, 0
      %p54 = por %p52, %p53
      %p55 = scmp.ne.s32.totalorder %s41, %s42
      %p56 = scmp.eq.s32.totalorder %s34, 1
      %p57 = por %p55, %p56
      %p59 = scmp.ne.s32.totalorder %s42, %s58
      %p60 = scmp.eq.s32.totalorder %s34, 0
      %p61 = por %p59, %p60
      %s63 = sadd.s32 %s62, 1
      %p66 = scmp.eq.s32.totalorder %s28, 1
      %p67 = scmp.ne.s32.totalorder %s62, %s64
      %p68 = scmp.eq.s32.totalorder %s28, 0
      %p69 = por %p67, %p68
      %p70 = scmp.ne.s32.totalorder %s62, %s64
      %p71 = scmp.eq.s32.totalorder %s33, 1
      %p72 = por %p70, %p71
      %p73 = scmp.ne.s32.totalorder %s64, %s65
      %p74 = scmp.eq.s32.totalorder %s33, 0
      %p75 = por %p73, %p74
      %p76 = scmp.ne.s32.totalorder %s64, %s65
      %p77 = scmp.eq.s32.totalorder %s34, 1
      %p78 = por %p76, %p77
      %p80 = scmp.ne.s32.totalorder %s65, %s79
      %p81 = scmp.eq.s32.totalorder %s34, 0
      %p82 = por %p80, %p81
      %s84 = sadd.s32 %s83, 1
      %p87 = scmp.eq.s32.totalorder %s28, 1
      %p88 = scmp.ne.s32.totalorder %s83, %s85
      %p89 = scmp.eq.s32.totalorder %s28, 0
      %p90 = por %p88, %p89
      %p91 = scmp.ne.s32.totalorder %s83, %s85
      %p92 = scmp.eq.s32.totalorder %s33, 1
      %p93 = por %p91, %p92
      %p94 = scmp.ne.s32.totalorder %s85, %s86
      %p95 = scmp.eq.s32.totalorder %s33, 0
      %p96 = por %p94, %p95
      %p97 = scmp.ne.s32.totalorder %s85, %s86
      %p98 = scmp.eq.s32.totalorder %s34, 1
      %p99 = por %p97, %p98
      %p101 = scmp.ne.s32.totalorder %s86, %s100
      %p102 = scmp.eq.s32.totalorder %s34, 0
      %p103 = por %p101, %p102
      %s105 = sadd.s32 %s104, 1
      %p108 = scmp.eq.s32.totalorder %s28, 1
      %p109 = scmp.ne.s32.totalorder %s104, %s106
      %p110 = scmp.eq.s32.totalorder %s28, 0
      %p111 = por %p109, %p110
      %p112 = scmp.ne.s32.totalorder %s104, %s106
      %p113 = scmp.eq.s32.totalorder %s33, 1
      %p114 = por %p112, %p113
      %p115 = scmp.ne.s32.totalorder %s106, %s107
      %p116 = scmp.eq.s32.totalorder %s33, 0
      %p117 = por %p115, %p116
      %p118 = scmp.ne.s32.totalorder %s106, %s107
      %p119 = scmp.eq.s32.totalorder %s34, 1
      %p120 = por %p118, %p119
      %p122 = scmp.ne.s32.totalorder %s107, %s121
      %p123 = scmp.eq.s32.totalorder %s34, 0
      %p124 = por %p122, %p123
      %s126 = sadd.s32 %s125, 1
      %p129 = scmp.eq.s32.totalorder %s28, 1
      %p130 = scmp.ne.s32.totalorder %s125, %s127
      %p131 = scmp.eq.s32.totalorder %s28, 0
      %p132 = por %p130, %p131
      %p133 = scmp.ne.s32.totalorder %s125, %s127
      %p134 = scmp.eq.s32.totalorder %s33, 1
      %p135 = por %p133, %p134
      %p136 = scmp.ne.s32.totalorder %s127, %s128
      %p137 = scmp.eq.s32.totalorder %s33, 0
      %p138 = por %p136, %p137
      %p139 = scmp.ne.s32.totalorder %s127, %s128
      %p140 = scmp.eq.s32.totalorder %s34, 1
      %p141 = por %p139, %p140
      %p143 = scmp.ne.s32.totalorder %s128, %s142
      %p144 = scmp.eq.s32.totalorder %s34, 0
      %p145 = por %p143, %p144
      %s147 = sadd.s32 %s146, 1
      %p150 = scmp.eq.s32.totalorder %s28, 1
      %p151 = scmp.ne.s32.totalorder %s146, %s148
      %p152 = scmp.eq.s32.totalorder %s28, 0
      %p153 = por %p151, %p152
      %p154 = scmp.ne.s32.totalorder %s146, %s148
      %p155 = scmp.eq.s32.totalorder %s33, 1
      %p156 = por %p154, %p155
      %p157 = scmp.ne.s32.totalorder %s148, %s149
      %p158 = scmp.eq.s32.totalorder %s33, 0
      %p159 = por %p157, %p158
      %p160 = scmp.ne.s32.totalorder %s148, %s149
      %p161 = scmp.eq.s32.totalorder %s34, 1
      %p162 = por %p160, %p161
      %p164 = scmp.ne.s32.totalorder %s149, %s163
      %p165 = scmp.eq.s32.totalorder %s34, 0
      %p166 = por %p164, %p165
      %s168 = sadd.s32 %s167, 1
      %p171 = scmp.eq.s32.totalorder %s28, 1
      %p172 = scmp.ne.s32.totalorder %s167, %s169
      %p173 = scmp.eq.s32.totalorder %s28, 0
      %p174 = por %p172, %p173
      %p175 = scmp.ne.s32.totalorder %s167, %s169
      %p176 = scmp.eq.s32.totalorder %s33, 1
      %p177 = por %p175, %p176
      %p178 = scmp.ne.s32.totalorder %s169, %s170
      %p179 = scmp.eq.s32.totalorder %s33, 0
      %p180 = por %p178, %p179
      %p181 = scmp.ne.s32.totalorder %s169, %s170
      %p182 = scmp.eq.s32.totalorder %s34, 1
      %p183 = por %p181, %p182
      %p185 = scmp.ne.s32.totalorder %s170, %s184
      %p186 = scmp.eq.s32.totalorder %s34, 0
      %p187 = por %p185, %p186
      %s189 = sadd.s32 %s188, 1
      %p192 = scmp.eq.s32.totalorder %s28, 1
      %p193 = scmp.ne.s32.totalorder %s188, %s190
      %p194 = scmp.eq.s32.totalorder %s28, 0
      %p195 = por %p193, %p194
      %p196 = scmp.ne.s32.totalorder %s188, %s190
      %p197 = scmp.eq.s32.totalorder %s33, 1
      %p198 = por %p196, %p197
      %p199 = scmp.ne.s32.totalorder %s190, %s191
      %p200 = scmp.eq.s32.totalorder %s33, 0
      %p201 = por %p199, %p200
      %p202 = scmp.ne.s32.totalorder %s190, %s191
      %p203 = scmp.eq.s32.totalorder %s34, 1
      %p204 = por %p202, %p203
      %p206 = scmp.ne.s32.totalorder %s191, %s205
      %p207 = scmp.eq.s32.totalorder %s34, 0
      %p208 = por %p206, %p207
      %s210 = sadd.s32 %s209, 1
      %p213 = scmp.eq.s32.totalorder %s28, 1
      %p214 = scmp.ne.s32.totalorder %s209, %s211
      %p215 = scmp.eq.s32.totalorder %s28, 0
      %p216 = por %p214, %p215
      %p217 = scmp.ne.s32.totalorder %s209, %s211
      %p218 = scmp.eq.s32.totalorder %s33, 1
      %p219 = por %p217, %p218
      %p220 = scmp.ne.s32.totalorder %s211, %s212
      %p221 = scmp.eq.s32.totalorder %s33, 0
      %p222 = por %p220, %p221
      %p223 = scmp.ne.s32.totalorder %s211, %s212
      %p224 = scmp.eq.s32.totalorder %s34, 1
      %p225 = por %p223, %p224
      %p227 = scmp.ne.s32.totalorder %s212, %s226
      %p228 = scmp.eq.s32.totalorder %s34, 0
      %p229 = por %p227, %p228
      %s231 = sadd.s32 %s230, 1
      %p234 = scmp.eq.s32.totalorder %s28, 1
      %p235 = scmp.ne.s32.totalorder %s230, %s232
      %p236 = scmp.eq.s32.totalorder %s28, 0
      %p237 = por %p235, %p236
      %p238 = scmp.ne.s32.totalorder %s230, %s232
      %p239 = scmp.eq.s32.totalorder %s33, 1
      %p240 = por %p238, %p239
      %p241 = scmp.ne.s32.totalorder %s232, %s233
      %p242 = scmp.eq.s32.totalorder %s33, 0
      %p243 = por %p241, %p242
      %p244 = scmp.ne.s32.totalorder %s232, %s233
      %p245 = scmp.eq.s32.totalorder %s34, 1
      %p246 = por %p244, %p245
      %p248 = scmp.ne.s32.totalorder %s233, %s247
      %p249 = scmp.eq.s32.totalorder %s34, 0
      %p250 = por %p248, %p249
      %s252 = sadd.s32 %s251, 1
      %p255 = scmp.eq.s32.totalorder %s28, 1
      %p256 = scmp.ne.s32.totalorder %s251, %s253
      %p257 = scmp.eq.s32.totalorder %s28, 0
      %p258 = por %p256, %p257
      %p259 = scmp.ne.s32.totalorder %s251, %s253
      %p260 = scmp.eq.s32.totalorder %s33, 1
      %p261 = por %p259, %p260
      %p262 = scmp.ne.s32.totalorder %s253, %s254
      %p263 = scmp.eq.s32.totalorder %s33, 0
      %p264 = por %p262, %p263
      %p265 = scmp.ne.s32.totalorder %s253, %s254
      %p266 = scmp.eq.s32.totalorder %s34, 1
      %p267 = por %p265, %p266
      %p269 = scmp.ne.s32.totalorder %s254, %s268
      %p270 = scmp.eq.s32.totalorder %s34, 0
      %p271 = por %p269, %p270
      %s273 = sadd.s32 %s272, 1
      %p276 = scmp.eq.s32.totalorder %s28, 1
      %p277 = scmp.ne.s32.totalorder %s272, %s274
      %p278 = scmp.eq.s32.totalorder %s28, 0
      %p279 = por %p277, %p278
      %p280 = scmp.ne.s32.totalorder %s272, %s274
      %p281 = scmp.eq.s32.totalorder %s33, 1
      %p282 = por %p280, %p281
      %p283 = scmp.ne.s32.totalorder %s274, %s275
      %p284 = scmp.eq.s32.totalorder %s33, 0
      %p285 = por %p283, %p284
      %p286 = scmp.ne.s32.totalorder %s274, %s275
      %p287 = scmp.eq.s32.totalorder %s34, 1
      %p288 = por %p286, %p287
      %p290 = scmp.ne.s32.totalorder %s275, %s289
      %p291 = scmp.eq.s32.totalorder %s34, 0
      %p292 = por %p290, %p291
      %s294 = sadd.s32 %s293, 1
      %p297 = scmp.eq.s32.totalorder %s28, 1
      %p298 = scmp.ne.s32.totalorder %s293, %s295
      %p299 = scmp.eq.s32.totalorder %s28, 0
      %p300 = por %p298, %p299
      %p301 = scmp.ne.s32.totalorder %s293, %s295
      %p302 = scmp.eq.s32.totalorder %s33, 1
      %p303 = por %p301, %p302
      %p304 = scmp.ne.s32.totalorder %s295, %s296
      %p305 = scmp.eq.s32.totalorder %s33, 0
      %p306 = por %p304, %p305
      %p307 = scmp.ne.s32.totalorder %s295, %s296
      %p308 = scmp.eq.s32.totalorder %s34, 1
      %p309 = por %p307, %p308
      %p311 = scmp.ne.s32.totalorder %s296, %s310
      %p312 = scmp.eq.s32.totalorder %s34, 0
      %p313 = por %p311, %p312
      %s314 = ssub.s32 %s28, %s35
      %p315 = scmp.eq.s32.totalorder %s314, 0
      %s317 = sadd.s32 %s316, 1
      %s318 = scalar_select %p315, %s316, %s317
      %p321 = pneg %p315
      %p322 = scmp.eq.s32.totalorder %s28, 1
      %p323 = por %p321, %p322
      %p324 = scmp.ne.s32.totalorder %s316, %s319
      %p325 = scmp.eq.s32.totalorder %s28, 0
      %p326 = por %p324, %p325
      %p327 = scmp.ne.s32.totalorder %s316, %s319
      %p328 = scmp.eq.s32.totalorder %s33, 1
      %p329 = por %p327, %p328
      %p330 = scmp.ne.s32.totalorder %s319, %s320
      %p331 = scmp.eq.s32.totalorder %s33, 0
      %p332 = por %p330, %p331
      %p333 = scmp.ne.s32.totalorder %s319, %s320
      %p334 = scmp.eq.s32.totalorder %s34, 1
      %p335 = por %p333, %p334
      %p337 = scmp.ne.s32.totalorder %s320, %s336
      %p338 = scmp.eq.s32.totalorder %s34, 0
      %p339 = por %p337, %p338
      %p340 = scmp.le.s32.totalorder 1, %s28
      %p341 = scmp.lt.s32.totalorder %s28, 3
      %p342 = pnand %p340, %p341
      %p343 = pneg %p342
      // Predicated region
      $region9: #{tpu_custom_call.1} parent=5 // pred_check
        _
      $region10: #{tpu_custom_call.1} parent=5 // pred_check_branch
        %345 = sbr.rel (%p342) target = $region12
      $region11: #{tpu_custom_call.1} parent=5 // pred_region
        %s346 = ssub.s32 %s28, 1
        // Predicated region
        $region13: #{tpu_custom_call.1} parent=11 // pred_check
          %p347 = pneg %p75
        $region14: #{tpu_custom_call.1} parent=11 // pred_check_branch
          %349 = sbr.rel (%p347) target = $region16
        $region15: #{tpu_custom_call.1} parent=11 // pred_region
          %s351 = ssub.s32 2048, 2048
          %352 = vsyncadd [#allocation6], %s351
          %s353 = sshll.u32 [#allocation5], 4
          %s354 = int_to_ptr.vmem [resolvable:$true] %s353
          %359 = dma.hbm_to_vmem [thread:$0]  %s1, 2048, %s354, [#allocation6], 128, 128, 8
        $region16: #{tpu_custom_call.1} parent=11 // pred_fallthru
          _
        // Predicated region
        $region17: #{tpu_custom_call.1} parent=11 // pred_check
          %p360 = pneg %p96
        $region18: #{tpu_custom_call.1} parent=11 // pred_check_branch
          %362 = sbr.rel (%p360) target = $region20
        $region19: #{tpu_custom_call.1} parent=11 // pred_region
          _
        $region20: #{tpu_custom_call.1} parent=11 // pred_fallthru
          _
        // Predicated region
        $region21: #{tpu_custom_call.1} parent=11 // pred_check
          %p363 = pneg %p117
        $region22: #{tpu_custom_call.1} parent=11 // pred_check_branch
          %365 = sbr.rel (%p363) target = $region24
        $region23: #{tpu_custom_call.1} parent=11 // pred_region
          %s367 = ssub.s32 2048, 2048
          %368 = vsyncadd [#allocation6], %s367
          %s369 = sshll.u32 [#allocation7], 4
          %s370 = int_to_ptr.vmem [resolvable:$true] %s369
          %375 = dma.hbm_to_vmem [thread:$0]  %s3, 2048, %s370, [#allocation6], 64, 64, 4
        $region24: #{tpu_custom_call.1} parent=11 // pred_fallthru
          _
        // Predicated region
        $region25: #{tpu_custom_call.1} parent=11 // pred_check
          %p376 = pneg %p138
        $region26: #{tpu_custom_call.1} parent=11 // pred_check_branch
          %378 = sbr.rel (%p376) target = $region28
        $region27: #{tpu_custom_call.1} parent=11 // pred_region
          _
        $region28: #{tpu_custom_call.1} parent=11 // pred_fallthru
          _
        // Predicated region
        $region29: #{tpu_custom_call.1} parent=11 // pred_check
          %p379 = pneg %p159
        $region30: #{tpu_custom_call.1} parent=11 // pred_check_branch
          %381 = sbr.rel (%p379) target = $region32
        $region31: #{tpu_custom_call.1} parent=11 // pred_region
          %s383 = ssub.s32 1024, 1024
          %384 = vsyncadd [#allocation9], %s383
          %s385 = sshll.u32 [#allocation8], 4
          %s386 = int_to_ptr.vmem [resolvable:$true] %s385
          %391 = dma.hbm_to_vmem [thread:$0]  %s5, 1024, %s386, [#allocation9], 64, 64, 4
        $region32: #{tpu_custom_call.1} parent=11 // pred_fallthru
          _
        // Predicated region
        $region33: #{tpu_custom_call.1} parent=11 // pred_check
          %p392 = pneg %p180
        $region34: #{tpu_custom_call.1} parent=11 // pred_check_branch
          %394 = sbr.rel (%p392) target = $region36
        $region35: #{tpu_custom_call.1} parent=11 // pred_region
          _
        $region36: #{tpu_custom_call.1} parent=11 // pred_fallthru
          _
        // Predicated region
        $region37: #{tpu_custom_call.1} parent=11 // pred_check
          %p395 = pneg %p201
        $region38: #{tpu_custom_call.1} parent=11 // pred_check_branch
          %397 = sbr.rel (%p395) target = $region40
        $region39: #{tpu_custom_call.1} parent=11 // pred_region
          %s399 = ssub.s32 1024, 1024
          %400 = vsyncadd [#allocation9], %s399
          %s401 = sshll.u32 [#allocation10], 4
          %s402 = int_to_ptr.vmem [resolvable:$true] %s401
          %407 = dma.hbm_to_vmem [thread:$0]  %s7, 1024, %s402, [#allocation9], 64, 64, 4
        $region40: #{tpu_custom_call.1} parent=11 // pred_fallthru
          _
        // Predicated region
        $region41: #{tpu_custom_call.1} parent=11 // pred_check
          %p408 = pneg %p222
        $region42: #{tpu_custom_call.1} parent=11 // pred_check_branch
          %410 = sbr.rel (%p408) target = $region44
        $region43: #{tpu_custom_call.1} parent=11 // pred_region
          _
        $region44: #{tpu_custom_call.1} parent=11 // pred_fallthru
          _
        // Predicated region
        $region45: #{tpu_custom_call.1} parent=11 // pred_check
          %p411 = pneg %p243
        $region46: #{tpu_custom_call.1} parent=11 // pred_check_branch
          %413 = sbr.rel (%p411) target = $region48
        $region47: #{tpu_custom_call.1} parent=11 // pred_region
          %s415 = ssub.s32 2048, 2048
          %416 = vsyncadd [#allocation12], %s415
          %s417 = sshll.u32 [#allocation11], 4
          %s418 = int_to_ptr.vmem [resolvable:$true] %s417
          %423 = dma.hbm_to_vmem [thread:$0]  %s9, 2048, %s418, [#allocation12], 128, 128, 8
        $region48: #{tpu_custom_call.1} parent=11 // pred_fallthru
          _
        // Predicated region
        $region49: #{tpu_custom_call.1} parent=11 // pred_check
          %p424 = pneg %p264
        $region50: #{tpu_custom_call.1} parent=11 // pred_check_branch
          %426 = sbr.rel (%p424) target = $region52
        $region51: #{tpu_custom_call.1} parent=11 // pred_region
          _
        $region52: #{tpu_custom_call.1} parent=11 // pred_fallthru
          _
        // Predicated region
        $region53: #{tpu_custom_call.1} parent=11 // pred_check
          %p427 = pneg %p285
        $region54: #{tpu_custom_call.1} parent=11 // pred_check_branch
          %429 = sbr.rel (%p427) target = $region56
        $region55: #{tpu_custom_call.1} parent=11 // pred_region
          %s431 = ssub.s32 2048, 2048
          %432 = vsyncadd [#allocation12], %s431
          %s433 = sshll.u32 [#allocation13], 4
          %s434 = int_to_ptr.vmem [resolvable:$true] %s433
          %439 = dma.hbm_to_vmem [thread:$0]  %s11, 2048, %s434, [#allocation12], 64, 64, 4
        $region56: #{tpu_custom_call.1} parent=11 // pred_fallthru
          _
        // Predicated region
        $region57: #{tpu_custom_call.1} parent=11 // pred_check
          %p440 = pneg %p306
        $region58: #{tpu_custom_call.1} parent=11 // pred_check_branch
          %442 = sbr.rel (%p440) target = $region60
        $region59: #{tpu_custom_call.1} parent=11 // pred_region
          _
        $region60: #{tpu_custom_call.1} parent=11 // pred_fallthru
          _
      $region12: #{tpu_custom_call.1} parent=5 // pred_fallthru
        _
      %p443 = scmp.lt.s32.totalorder %s28, 2
      // Predicated region
      $region61: #{tpu_custom_call.1} parent=5 // pred_check
        %p444 = pneg %p443
      $region62: #{tpu_custom_call.1} parent=5 // pred_check_branch
        %446 = sbr.rel (%p444) target = $region64
      $region63: #{tpu_custom_call.1} parent=5 // pred_region
        // Predicated region
        $region65: #{tpu_custom_call.1} parent=63 // pred_check
          %p447 = pneg %p48
        $region66: #{tpu_custom_call.1} parent=63 // pred_check_branch
          %449 = sbr.rel (%p447) target = $region68
        $region67: #{tpu_custom_call.1} parent=63 // pred_region
          %s450 = sand.u32 %s38, 1
          %s451 = scalar_lea.sflag [#allocation3], %s450
          %s452 = sand.u32 %s38, 1
          %s453 = smul.addr %s452, 128
          %s454 = scalar_lea.vmem [#allocation2], %s453
          %s455 = smul.u32 16, %s28
          %s457 = ssub.s32 2048, 2048
          %458 = vsyncadd %s451, %s457
          %s459 = smul.addr %s455, 128
          %s460 = scalar_lea.hbm %s0, %s459
          %s461 = sshll.u32 %s454, 4
          %s462 = int_to_ptr.vmem [resolvable:$true] %s461
          %467 = dma.hbm_to_vmem [thread:$0]  %s460, 2048, %s462, %s451, 128, 128, 8
        $region68: #{tpu_custom_call.1} parent=63 // pred_fallthru
          _
      $region64: #{tpu_custom_call.1} parent=5 // pred_fallthru
        _
      %p468 = scmp.le.s32.totalorder 1, %s28
      %p469 = scmp.lt.s32.totalorder %s28, 3
      %p470 = pnand %p468, %p469
      %p471 = pneg %p470
      // Predicated region
      $region69: #{tpu_custom_call.1} parent=5 // pred_check
        _
      $region70: #{tpu_custom_call.1} parent=5 // pred_check_branch
        %473 = sbr.rel (%p470) target = $region72
      $region71: #{tpu_custom_call.1} parent=5 // pred_region
        %s474 = ssub.s32 %s28, 1
        %s475 = sand.u32 %s41, 1
        %s476 = scalar_lea.sflag [#allocation3], %s475
        %s477 = sand.u32 %s41, 1
        %s478 = smul.addr %s477, 128
        %s479 = scalar_lea.vmem [#allocation2], %s478
        // Predicated region
        $region73: #{tpu_custom_call.1} parent=71 // pred_check
          %p480 = pneg %p54
        $region74: #{tpu_custom_call.1} parent=71 // pred_check_branch
          %482 = sbr.rel (%p480) target = $region76
        $region75: #{tpu_custom_call.1} parent=71 // pred_region
          %483 = dma.done %s476, 2048
        $region76: #{tpu_custom_call.1} parent=71 // pred_fallthru
          _
        // Predicated region
        $region77: #{tpu_custom_call.1} parent=71 // pred_check
          %p484 = pneg %p75
        $region78: #{tpu_custom_call.1} parent=71 // pred_check_branch
          %486 = sbr.rel (%p484) target = $region80
        $region79: #{tpu_custom_call.1} parent=71 // pred_region
          %487 = dma.done [#allocation6], 2048
        $region80: #{tpu_custom_call.1} parent=71 // pred_fallthru
          _
        // Predicated region
        $region81: #{tpu_custom_call.1} parent=71 // pred_check
          %p488 = pneg %p117
        $region82: #{tpu_custom_call.1} parent=71 // pred_check_branch
          %490 = sbr.rel (%p488) target = $region84
        $region83: #{tpu_custom_call.1} parent=71 // pred_region
          %491 = dma.done [#allocation6], 2048
        $region84: #{tpu_custom_call.1} parent=71 // pred_fallthru
          _
        // Predicated region
        $region85: #{tpu_custom_call.1} parent=71 // pred_check
          %p492 = pneg %p159
        $region86: #{tpu_custom_call.1} parent=71 // pred_check_branch
          %494 = sbr.rel (%p492) target = $region88
        $region87: #{tpu_custom_call.1} parent=71 // pred_region
          %495 = dma.done [#allocation9], 1024
        $region88: #{tpu_custom_call.1} parent=71 // pred_fallthru
          _
        // Predicated region
        $region89: #{tpu_custom_call.1} parent=71 // pred_check
          %p496 = pneg %p201
        $region90: #{tpu_custom_call.1} parent=71 // pred_check_branch
          %498 = sbr.rel (%p496) target = $region92
        $region91: #{tpu_custom_call.1} parent=71 // pred_region
          %499 = dma.done [#allocation9], 1024
        $region92: #{tpu_custom_call.1} parent=71 // pred_fallthru
          _
        // Predicated region
        $region93: #{tpu_custom_call.1} parent=71 // pred_check
          %p500 = pneg %p243
        $region94: #{tpu_custom_call.1} parent=71 // pred_check_branch
          %502 = sbr.rel (%p500) target = $region96
        $region95: #{tpu_custom_call.1} parent=71 // pred_region
          %503 = dma.done [#allocation12], 2048
        $region96: #{tpu_custom_call.1} parent=71 // pred_fallthru
          _
        // Predicated region
        $region97: #{tpu_custom_call.1} parent=71 // pred_check
          %p504 = pneg %p285
        $region98: #{tpu_custom_call.1} parent=71 // pred_check_branch
          %506 = sbr.rel (%p504) target = $region100
        $region99: #{tpu_custom_call.1} parent=71 // pred_region
          %507 = dma.done [#allocation12], 2048
        $region100: #{tpu_custom_call.1} parent=71 // pred_fallthru
          _
        %s508 = sand.u32 %s41, 1
        %s509 = scalar_lea.sflag [#allocation3], %s508
        %s510 = sand.u32 %s41, 1
        %s511 = smul.addr %s510, 128
        %s512 = scalar_lea.vmem [#allocation2], %s511
        %p513 = pneg %p54
        %p514 = pneg %p51
        %p515 = pneg %p75
        %p516 = pneg %p72
        %p517 = pneg %p96
        %p518 = pneg %p93
        %p519 = pneg %p117
        %p520 = pneg %p114
        %p521 = pneg %p138
        %p522 = pneg %p135
        %p523 = pneg %p159
        %p524 = pneg %p156
        %p525 = pneg %p180
        %p526 = pneg %p177
        %p527 = pneg %p201
        %p528 = pneg %p198
        %p529 = pneg %p222
        %p530 = pneg %p219
        %p531 = pneg %p243
        %p532 = pneg %p240
        %p533 = pneg %p264
        %p534 = pneg %p261
        %p535 = pneg %p285
        %p536 = pneg %p282
        %p537 = pneg %p306
        %p538 = pneg %p303
        %p539 = pneg %p332
        %p540 = pneg %p329
        %s541 = sand.u32 %s319, 1
        %s542 = scalar_lea.sflag [#allocation4], %s541
        %s543 = sand.u32 %s319, 1
        %s544 = smul.addr %s543, 128
        %s545 = scalar_lea.vmem [#allocation14], %s544
        %s546 = smul.u32 16, %s33
        %s547 = smul.u32 16, %s33
        %v549 = vld [vmem:[%s479] sm:$0xff]
        %v550 = vld [vmem:[%s479 + $0x8] sm:$0xff]
        %v551 = vld [vmem:[%s479 + $0x10] sm:$0xff]
        %v552 = vld [vmem:[%s479 + $0x18] sm:$0xff]
        %v553 = vld [vmem:[%s479 + $0x20] sm:$0xff]
        %v554 = vld [vmem:[%s479 + $0x28] sm:$0xff]
        %v555 = vld [vmem:[%s479 + $0x30] sm:$0xff]
        %v556 = vld [vmem:[%s479 + $0x38] sm:$0xff]
        %v557 = vld [vmem:[%s479 + $0x40] sm:$0xff]
        %v558 = vld [vmem:[%s479 + $0x48] sm:$0xff]
        %v559 = vld [vmem:[%s479 + $0x50] sm:$0xff]
        %v560 = vld [vmem:[%s479 + $0x58] sm:$0xff]
        %v561 = vld [vmem:[%s479 + $0x60] sm:$0xff]
        %v562 = vld [vmem:[%s479 + $0x68] sm:$0xff]
        %v563 = vld [vmem:[%s479 + $0x70] sm:$0xff]
        %v564 = vld [vmem:[%s479 + $0x78] sm:$0xff]
        %v565 = vpack.c.bf16 %v550, %v549
        %v566 = vpack.c.bf16 %v552, %v551
        %v567 = vpack.c.bf16 %v554, %v553
        %v568 = vpack.c.bf16 %v556, %v555
        %v569 = vpack.c.bf16 %v558, %v557
        %v570 = vpack.c.bf16 %v560, %v559
        %v571 = vpack.c.bf16 %v562, %v561
        %v572 = vpack.c.bf16 %v564, %v563
        %v573 = vld [vmem:[#allocation5] sm:$0xff]
        %v574 = vld [vmem:[#allocation5 + $0x8] sm:$0xff]
        %v575 = vld [vmem:[#allocation5 + $0x10] sm:$0xff]
        %v576 = vld [vmem:[#allocation5 + $0x18] sm:$0xff]
        %v577 = vld [vmem:[#allocation5 + $0x20] sm:$0xff]
        %v578 = vld [vmem:[#allocation5 + $0x28] sm:$0xff]
        %v579 = vld [vmem:[#allocation5 + $0x30] sm:$0xff]
        %v580 = vld [vmem:[#allocation5 + $0x38] sm:$0xff]
        %v581 = vld [vmem:[#allocation5 + $0x40] sm:$0xff]
        %v582 = vld [vmem:[#allocation5 + $0x48] sm:$0xff]
        %v583 = vld [vmem:[#allocation5 + $0x50] sm:$0xff]
        %v584 = vld [vmem:[#allocation5 + $0x58] sm:$0xff]
        %v585 = vld [vmem:[#allocation5 + $0x60] sm:$0xff]
        %v586 = vld [vmem:[#allocation5 + $0x68] sm:$0xff]
        %v587 = vld [vmem:[#allocation5 + $0x70] sm:$0xff]
        %v588 = vld [vmem:[#allocation5 + $0x78] sm:$0xff]
        %v589 = vld [vmem:[%s2] sm:$0x3]
        %v591 = vlaneseq
        %v592 = vshrl.u32 %v591, 7
        %v593 = vsub.s32 0, %v592
        %v594 = vrot.slane %v589, %v593
        %v595 = vlaneseq
        %v596 = vshrl.u32 %v595, 7
        %v597 = vsub.s32 1, %v596
        %v598 = vrot.slane %v589, %v597
        %v617 = vunpack.c.l.b16 %v573
        %v618 = vunpack.c.h.b16 %v573
        %v619 = vunpack.c.l.b16 %v574
        %v620 = vunpack.c.h.b16 %v574
        %v621 = vunpack.c.l.b16 %v575
        %v622 = vunpack.c.h.b16 %v575
        %v623 = vunpack.c.l.b16 %v576
        %v624 = vunpack.c.h.b16 %v576
        %v625 = vunpack.c.l.b16 %v577
        %v626 = vunpack.c.h.b16 %v577
        %v627 = vunpack.c.l.b16 %v578
        %v628 = vunpack.c.h.b16 %v578
        %v629 = vunpack.c.l.b16 %v579
        %v630 = vunpack.c.h.b16 %v579
        %v631 = vunpack.c.l.b16 %v580
        %v632 = vunpack.c.h.b16 %v580
        %v633 = vunpack.c.l.b16 %v581
        %v634 = vunpack.c.h.b16 %v581
        %v635 = vunpack.c.l.b16 %v582
        %v636 = vunpack.c.h.b16 %v582
        %v637 = vunpack.c.l.b16 %v583
        %v638 = vunpack.c.h.b16 %v583
        %v639 = vunpack.c.l.b16 %v584
        %v640 = vunpack.c.h.b16 %v584
        %v641 = vunpack.c.l.b16 %v585
        %v642 = vunpack.c.h.b16 %v585
        %v643 = vunpack.c.l.b16 %v586
        %v644 = vunpack.c.h.b16 %v586
        %v645 = vunpack.c.l.b16 %v587
        %v646 = vunpack.c.h.b16 %v587
        %v647 = vunpack.c.l.b16 %v588
        %v648 = vunpack.c.h.b16 %v588
        %v649 = vpack.c.b16 %v619, %v617
        %v650 = vpack.c.b16 %v620, %v618
        %v651 = vpack.c.b16 %v623, %v621
        %v652 = vpack.c.b16 %v624, %v622
        %v653 = vpack.c.b16 %v627, %v625
        %v654 = vpack.c.b16 %v628, %v626
        %v655 = vpack.c.b16 %v631, %v629
        %v656 = vpack.c.b16 %v632, %v630
        %v657 = vpack.c.b16 %v635, %v633
        %v658 = vpack.c.b16 %v636, %v634
        %v659 = vpack.c.b16 %v639, %v637
        %v660 = vpack.c.b16 %v640, %v638
        %v661 = vpack.c.b16 %v643, %v641
        %v662 = vpack.c.b16 %v644, %v642
        %v663 = vpack.c.b16 %v647, %v645
        %v664 = vpack.c.b16 %v648, %v646
        %681 = vmatprep.subr.bf16.mxu0 %v650
        %682 = vmatpush1.bf16.msra.mxu0 %v649
        %683 = vmatprep.subr.bf16.mxu0 %v652
        %684 = vmatpush1.bf16.msra.mxu0 %v651
        %685 = vmatprep.subr.bf16.mxu0 %v654
        %686 = vmatpush1.bf16.msra.mxu0 %v653
        %687 = vmatprep.subr.bf16.mxu0 %v656
        %688 = vmatpush1.bf16.msra.mxu0 %v655
        %689 = vmatprep.subr.bf16.mxu0 %v658
        %690 = vmatpush1.bf16.msra.mxu0 %v657
        %691 = vmatprep.subr.bf16.mxu0 %v660
        %692 = vmatpush1.bf16.msra.mxu0 %v659
        %693 = vmatprep.subr.bf16.mxu0 %v662
        %694 = vmatpush1.bf16.msra.mxu0 %v661
        %695 = vmatprep.subr.bf16.mxu0 %v664
        %696 = vmatpush1.bf16.msra.mxu0 %v663
        %697 = vmatprep.subr.bf16.mxu0 0
        %698 = vmatpush1.bf16.msra.mxu0 0
        %699 = vmatprep.subr.bf16.mxu0 0
        %700 = vmatpush1.bf16.msra.mxu0 0
        %701 = vmatprep.subr.bf16.mxu0 0
        %702 = vmatpush1.bf16.msra.mxu0 0
        %703 = vmatprep.subr.bf16.mxu0 0
        %704 = vmatpush1.bf16.msra.mxu0 0
        %705 = vmatprep.subr.bf16.mxu0 0
        %706 = vmatpush1.bf16.msra.mxu0 0
        %707 = vmatprep.subr.bf16.mxu0 0
        %708 = vmatpush1.bf16.msra.mxu0 0
        %709 = vmatprep.subr.bf16.mxu0 0
        %710 = vmatpush1.bf16.msra.mxu0 0
        %711 = vmatprep.subr.bf16.mxu0 0
        %712 = vmatpush1.bf16.msra.mxu0 0
        %713 = vmatprep.mubr.bf16.mxu0 0
        %714 = vmatmul.mubr.bf16.gmra.mrb[0].mxu0 %v565
        %v715 = vpop.f32.mrb[0].mxu0
        %v716 = vadd.f32 %v594, %v715
        %v717 = vpop.f32.mrb[0].mxu0
        %v718 = vadd.f32 %v598, %v717
        %v719 = vpop.f32.mrb[0].mxu0
        %v720 = vadd.f32 %v594, %v719
        %v721 = vpop.f32.mrb[0].mxu0
        %v722 = vadd.f32 %v598, %v721
        %723 = vmatprep.mubr.bf16.mxu0 0
        %724 = vmatmul.mubr.bf16.gmra.mrb[0].mxu0 %v566
        %v725 = vpop.f32.mrb[0].mxu0
        %v726 = vadd.f32 %v594, %v725
        %v727 = vpop.f32.mrb[0].mxu0
        %v728 = vadd.f32 %v598, %v727
        %v729 = vpop.f32.mrb[0].mxu0
        %v730 = vadd.f32 %v594, %v729
        %v731 = vpop.f32.mrb[0].mxu0
        %v732 = vadd.f32 %v598, %v731
        %733 = vmatprep.mubr.bf16.mxu0 0
        %734 = vmatmul.mubr.bf16.gmra.mrb[0].mxu0 %v567
        %v735 = vpop.f32.mrb[0].mxu0
        %v736 = vadd.f32 %v594, %v735
        %v737 = vpop.f32.mrb[0].mxu0
        %v738 = vadd.f32 %v598, %v737
        %v739 = vpop.f32.mrb[0].mxu0
        %v740 = vadd.f32 %v594, %v739
        %v741 = vpop.f32.mrb[0].mxu0
        %v742 = vadd.f32 %v598, %v741
        %743 = vmatprep.mubr.bf16.mxu0 0
        %744 = vmatmul.mubr.bf16.gmra.mrb[0].mxu0 %v568
        %v745 = vpop.f32.mrb[0].mxu0
        %v746 = vadd.f32 %v594, %v745
        %v747 = vpop.f32.mrb[0].mxu0
        %v748 = vadd.f32 %v598, %v747
        %v749 = vpop.f32.mrb[0].mxu0
        %v750 = vadd.f32 %v594, %v749
        %v751 = vpop.f32.mrb[0].mxu0
        %v752 = vadd.f32 %v598, %v751
        %753 = vmatprep.mubr.bf16.mxu0 0
        %754 = vmatmul.mubr.bf16.gmra.mrb[0].mxu0 %v569
        %v755 = vpop.f32.mrb[0].mxu0
        %v756 = vadd.f32 %v594, %v755
        %v757 = vpop.f32.mrb[0].mxu0
        %v758 = vadd.f32 %v598, %v757
        %v759 = vpop.f32.mrb[0].mxu0
        %v760 = vadd.f32 %v594, %v759
        %v761 = vpop.f32.mrb[0].mxu0
        %v762 = vadd.f32 %v598, %v761
        %763 = vmatprep.mubr.bf16.mxu0 0
        %764 = vmatmul.mubr.bf16.gmra.mrb[0].mxu0 %v570
        %v765 = vpop.f32.mrb[0].mxu0
        %v766 = vadd.f32 %v594, %v765
        %v767 = vpop.f32.mrb[0].mxu0
        %v768 = vadd.f32 %v598, %v767
        %v769 = vpop.f32.mrb[0].mxu0
        %v770 = vadd.f32 %v594, %v769
        %v771 = vpop.f32.mrb[0].mxu0
        %v772 = vadd.f32 %v598, %v771
        %773 = vmatprep.mubr.bf16.mxu0 0
        %774 = vmatmul.mubr.bf16.gmra.mrb[0].mxu0 %v571
        %v775 = vpop.f32.mrb[0].mxu0
        %v776 = vadd.f32 %v594, %v775
        %v777 = vpop.f32.mrb[0].mxu0
        %v778 = vadd.f32 %v598, %v777
        %v779 = vpop.f32.mrb[0].mxu0
        %v780 = vadd.f32 %v594, %v779
        %v781 = vpop.f32.mrb[0].mxu0
        %v782 = vadd.f32 %v598, %v781
        %783 = vmatprep.mubr.bf16.mxu0 0
        %784 = vmatmul.mubr.bf16.gmra.mrb[0].mxu0 %v572
        %v785 = vpop.f32.mrb[0].mxu0
        %v786 = vadd.f32 %v594, %v785
        %v787 = vpop.f32.mrb[0].mxu0
        %v788 = vadd.f32 %v598, %v787
        %v789 = vpop.f32.mrb[0].mxu0
        %v790 = vadd.f32 %v594, %v789
        %v791 = vpop.f32.mrb[0].mxu0
        %v792 = vadd.f32 %v598, %v791
        %793 = vdwg.mxu0
        %v794 = vmul.f32 %v716, 0.2
        %v795 = vmul.f32 %v718, 0.2
        %v796 = vmul.f32 %v720, 0.2
        %v797 = vmul.f32 %v722, 0.2
        %v798 = vmul.f32 %v726, 0.2
        %v799 = vmul.f32 %v728, 0.2
        %v800 = vmul.f32 %v730, 0.2
        %v801 = vmul.f32 %v732, 0.2
        %v802 = vmul.f32 %v736, 0.2
        %v803 = vmul.f32 %v738, 0.2
        %v804 = vmul.f32 %v740, 0.2
        %v805 = vmul.f32 %v742, 0.2
        %v806 = vmul.f32 %v746, 0.2
        %v807 = vmul.f32 %v748, 0.2
        %v808 = vmul.f32 %v750, 0.2
        %v809 = vmul.f32 %v752, 0.2
        %v810 = vmul.f32 %v756, 0.2
        %v811 = vmul.f32 %v758, 0.2
        %v812 = vmul.f32 %v760, 0.2
        %v813 = vmul.f32 %v762, 0.2
        %v814 = vmul.f32 %v766, 0.2
        %v815 = vmul.f32 %v768, 0.2
        %v816 = vmul.f32 %v770, 0.2
        %v817 = vmul.f32 %v772, 0.2
        %v818 = vmul.f32 %v776, 0.2
        %v819 = vmul.f32 %v778, 0.2
        %v820 = vmul.f32 %v780, 0.2
        %v821 = vmul.f32 %v782, 0.2
        %v822 = vmul.f32 %v786, 0.2
        %v823 = vmul.f32 %v788, 0.2
        %v824 = vmul.f32 %v790, 0.2
        %v825 = vmul.f32 %v792, 0.2
        %v826 = vmax.f32 %v716, %v794
        %v827 = vmax.f32 %v718, %v795
        %v828 = vmax.f32 %v720, %v796
        %v829 = vmax.f32 %v722, %v797
        %v830 = vmax.f32 %v726, %v798
        %v831 = vmax.f32 %v728, %v799
        %v832 = vmax.f32 %v730, %v800
        %v833 = vmax.f32 %v732, %v801
        %v834 = vmax.f32 %v736, %v802
        %v835 = vmax.f32 %v738, %v803
        %v836 = vmax.f32 %v740, %v804
        %v837 = vmax.f32 %v742, %v805
        %v838 = vmax.f32 %v746, %v806
        %v839 = vmax.f32 %v748, %v807
        %v840 = vmax.f32 %v750, %v808
        %v841 = vmax.f32 %v752, %v809
        %v842 = vmax.f32 %v756, %v810
        %v843 = vmax.f32 %v758, %v811
        %v844 = vmax.f32 %v760, %v812
        %v845 = vmax.f32 %v762, %v813
        %v846 = vmax.f32 %v766, %v814
        %v847 = vmax.f32 %v768, %v815
        %v848 = vmax.f32 %v770, %v816
        %v849 = vmax.f32 %v772, %v817
        %v850 = vmax.f32 %v776, %v818
        %v851 = vmax.f32 %v778, %v819
        %v852 = vmax.f32 %v780, %v820
        %v853 = vmax.f32 %v782, %v821
        %v854 = vmax.f32 %v786, %v822
        %v855 = vmax.f32 %v788, %v823
        %v856 = vmax.f32 %v790, %v824
        %v857 = vmax.f32 %v792, %v825
        %v858 = vpack.c.bf16 %v828, %v826
        %v859 = vpack.c.bf16 %v829, %v827
        %v860 = vpack.c.bf16 %v832, %v830
        %v861 = vpack.c.bf16 %v833, %v831
        %v862 = vpack.c.bf16 %v836, %v834
        %v863 = vpack.c.bf16 %v837, %v835
        %v864 = vpack.c.bf16 %v840, %v838
        %v865 = vpack.c.bf16 %v841, %v839
        %v866 = vpack.c.bf16 %v844, %v842
        %v867 = vpack.c.bf16 %v845, %v843
        %v868 = vpack.c.bf16 %v848, %v846
        %v869 = vpack.c.bf16 %v849, %v847
        %v870 = vpack.c.bf16 %v852, %v850
        %v871 = vpack.c.bf16 %v853, %v851
        %v872 = vpack.c.bf16 %v856, %v854
        %v873 = vpack.c.bf16 %v857, %v855
        %v874 = vld [vmem:[#allocation7] sm:$0xf]
        %v875 = vld [vmem:[#allocation7 + $0x4] sm:$0xf]
        %v876 = vld [vmem:[#allocation7 + $0x8] sm:$0xf]
        %v877 = vld [vmem:[#allocation7 + $0xc] sm:$0xf]
        %v878 = vld [vmem:[#allocation7 + $0x10] sm:$0xf]
        %v879 = vld [vmem:[#allocation7 + $0x14] sm:$0xf]
        %v880 = vld [vmem:[#allocation7 + $0x18] sm:$0xf]
        %v881 = vld [vmem:[#allocation7 + $0x1c] sm:$0xf]
        %v882 = vld [vmem:[#allocation7 + $0x20] sm:$0xf]
        %v883 = vld [vmem:[#allocation7 + $0x24] sm:$0xf]
        %v884 = vld [vmem:[#allocation7 + $0x28] sm:$0xf]
        %v885 = vld [vmem:[#allocation7 + $0x2c] sm:$0xf]
        %v886 = vld [vmem:[#allocation7 + $0x30] sm:$0xf]
        %v887 = vld [vmem:[#allocation7 + $0x34] sm:$0xf]
        %v888 = vld [vmem:[#allocation7 + $0x38] sm:$0xf]
        %v889 = vld [vmem:[#allocation7 + $0x3c] sm:$0xf]
        %v890 = vld [vmem:[#allocation7 + $0x40] sm:$0xf]
        %v891 = vld [vmem:[#allocation7 + $0x44] sm:$0xf]
        %v892 = vld [vmem:[#allocation7 + $0x48] sm:$0xf]
        %v893 = vld [vmem:[#allocation7 + $0x4c] sm:$0xf]
        %v894 = vld [vmem:[#allocation7 + $0x50] sm:$0xf]
        %v895 = vld [vmem:[#allocation7 + $0x54] sm:$0xf]
        %v896 = vld [vmem:[#allocation7 + $0x58] sm:$0xf]
        %v897 = vld [vmem:[#allocation7 + $0x5c] sm:$0xf]
        %v898 = vld [vmem:[#allocation7 + $0x60] sm:$0xf]
        %v899 = vld [vmem:[#allocation7 + $0x64] sm:$0xf]
        %v900 = vld [vmem:[#allocation7 + $0x68] sm:$0xf]
        %v901 = vld [vmem:[#allocation7 + $0x6c] sm:$0xf]
        %v902 = vld [vmem:[#allocation7 + $0x70] sm:$0xf]
        %v903 = vld [vmem:[#allocation7 + $0x74] sm:$0xf]
        %v904 = vld [vmem:[#allocation7 + $0x78] sm:$0xf]
        %v905 = vld [vmem:[#allocation7 + $0x7c] sm:$0xf]
        %v906 = vld [vmem:[%s4] sm:$0x1]
        %v908 = vlaneseq
        %v909 = vshrl.u32 %v908, 7
        %v910 = vsub.s32 0, %v909
        %v911 = vrot.slane %v906, %v910
        %v945 = vunpack.c.l.b16 %v874
        %v946 = vunpack.c.l.b16 %v875
        %v947 = vunpack.c.l.b16 %v876
        %v948 = vunpack.c.l.b16 %v877
        %v949 = vunpack.c.l.b16 %v878
        %v950 = vunpack.c.l.b16 %v879
        %v951 = vunpack.c.l.b16 %v880
        %v952 = vunpack.c.l.b16 %v881
        %v953 = vunpack.c.l.b16 %v882
        %v954 = vunpack.c.l.b16 %v883
        %v955 = vunpack.c.l.b16 %v884
        %v956 = vunpack.c.l.b16 %v885
        %v957 = vunpack.c.l.b16 %v886
        %v958 = vunpack.c.l.b16 %v887
        %v959 = vunpack.c.l.b16 %v888
        %v960 = vunpack.c.l.b16 %v889
        %v961 = vunpack.c.l.b16 %v890
        %v962 = vunpack.c.l.b16 %v891
        %v963 = vunpack.c.l.b16 %v892
        %v964 = vunpack.c.l.b16 %v893
        %v965 = vunpack.c.l.b16 %v894
        %v966 = vunpack.c.l.b16 %v895
        %v967 = vunpack.c.l.b16 %v896
        %v968 = vunpack.c.l.b16 %v897
        %v969 = vunpack.c.l.b16 %v898
        %v970 = vunpack.c.l.b16 %v899
        %v971 = vunpack.c.l.b16 %v900
        %v972 = vunpack.c.l.b16 %v901
        %v973 = vunpack.c.l.b16 %v902
        %v974 = vunpack.c.l.b16 %v903
        %v975 = vunpack.c.l.b16 %v904
        %v976 = vunpack.c.l.b16 %v905
        %v977 = vpack.c.b16 %v946, %v945
        %v978 = vpack.c.b16 %v948, %v947
        %v979 = vpack.c.b16 %v950, %v949
        %v980 = vpack.c.b16 %v952, %v951
        %v981 = vpack.c.b16 %v954, %v953
        %v982 = vpack.c.b16 %v956, %v955
        %v983 = vpack.c.b16 %v958, %v957
        %v984 = vpack.c.b16 %v960, %v959
        %v985 = vpack.c.b16 %v962, %v961
        %v986 = vpack.c.b16 %v964, %v963
        %v987 = vpack.c.b16 %v966, %v965
        %v988 = vpack.c.b16 %v968, %v967
        %v989 = vpack.c.b16 %v970, %v969
        %v990 = vpack.c.b16 %v972, %v971
        %v991 = vpack.c.b16 %v974, %v973
        %v992 = vpack.c.b16 %v976, %v975
        %1009 = vmatprep.subr.bf16.mxu0 0
        %1010 = vmatpush1.bf16.msra.mxu0 %v977
        %1011 = vmatprep.subr.bf16.mxu0 0
        %1012 = vmatpush1.bf16.msra.mxu0 %v978
        %1013 = vmatprep.subr.bf16.mxu0 0
        %1014 = vmatpush1.bf16.msra.mxu0 %v979
        %1015 = vmatprep.subr.bf16.mxu0 0
        %1016 = vmatpush1.bf16.msra.mxu0 %v980
        %1017 = vmatprep.subr.bf16.mxu0 0
        %1018 = vmatpush1.bf16.msra.mxu0 %v981
        %1019 = vmatprep.subr.bf16.mxu0 0
        %1020 = vmatpush1.bf16.msra.mxu0 %v982
        %1021 = vmatprep.subr.bf16.mxu0 0
        %1022 = vmatpush1.bf16.msra.mxu0 %v983
        %1023 = vmatprep.subr.bf16.mxu0 0
        %1024 = vmatpush1.bf16.msra.mxu0 %v984
        %1025 = vmatprep.subr.bf16.mxu0 0
        %1026 = vmatpush1.bf16.msra.mxu0 %v985
        %1027 = vmatprep.subr.bf16.mxu0 0
        %1028 = vmatpush1.bf16.msra.mxu0 %v986
        %1029 = vmatprep.subr.bf16.mxu0 0
        %1030 = vmatpush1.bf16.msra.mxu0 %v987
        %1031 = vmatprep.subr.bf16.mxu0 0
        %1032 = vmatpush1.bf16.msra.mxu0 %v988
        %1033 = vmatprep.subr.bf16.mxu0 0
        %1034 = vmatpush1.bf16.msra.mxu0 %v989
        %1035 = vmatprep.subr.bf16.mxu0 0
        %1036 = vmatpush1.bf16.msra.mxu0 %v990
        %1037 = vmatprep.subr.bf16.mxu0 0
        %1038 = vmatpush1.bf16.msra.mxu0 %v991
        %1039 = vmatprep.subr.bf16.mxu0 0
        %1040 = vmatpush1.bf16.msra.mxu0 %v992
        %1041 = vmatprep.mubr.bf16.mxu0 %v859
        %1042 = vmatmul.mubr.bf16.gmra.mrb[0].mxu0 %v858
        %v1043 = vpop.f32.mrb[0].mxu0
        %v1044 = vadd.f32 %v911, %v1043
        %v1045 = vpop.f32.mrb[0].mxu0
        %v1046 = vpop.f32.mrb[0].mxu0
        %v1047 = vadd.f32 %v911, %v1046
        %v1048 = vpop.f32.mrb[0].mxu0
        %1049 = vmatprep.mubr.bf16.mxu0 %v861
        %1050 = vmatmul.mubr.bf16.gmra.mrb[0].mxu0 %v860
        %v1051 = vpop.f32.mrb[0].mxu0
        %v1052 = vadd.f32 %v911, %v1051
        %v1053 = vpop.f32.mrb[0].mxu0
        %v1054 = vpop.f32.mrb[0].mxu0
        %v1055 = vadd.f32 %v911, %v1054
        %v1056 = vpop.f32.mrb[0].mxu0
        %1057 = vmatprep.mubr.bf16.mxu0 %v863
        %1058 = vmatmul.mubr.bf16.gmra.mrb[0].mxu0 %v862
        %v1059 = vpop.f32.mrb[0].mxu0
        %v1060 = vadd.f32 %v911, %v1059
        %v1061 = vpop.f32.mrb[0].mxu0
        %v1062 = vpop.f32.mrb[0].mxu0
        %v1063 = vadd.f32 %v911, %v1062
        %v1064 = vpop.f32.mrb[0].mxu0
        %1065 = vmatprep.mubr.bf16.mxu0 %v865
        %1066 = vmatmul.mubr.bf16.gmra.mrb[0].mxu0 %v864
        %v1067 = vpop.f32.mrb[0].mxu0
        %v1068 = vadd.f32 %v911, %v1067
        %v1069 = vpop.f32.mrb[0].mxu0
        %v1070 = vpop.f32.mrb[0].mxu0
        %v1071 = vadd.f32 %v911, %v1070
        %v1072 = vpop.f32.mrb[0].mxu0
        %1073 = vmatprep.mubr.bf16.mxu0 %v867
        %1074 = vmatmul.mubr.bf16.gmra.mrb[0].mxu0 %v866
        %v1075 = vpop.f32.mrb[0].mxu0
        %v1076 = vadd.f32 %v911, %v1075
        %v1077 = vpop.f32.mrb[0].mxu0
        %v1078 = vpop.f32.mrb[0].mxu0
        %v1079 = vadd.f32 %v911, %v1078
        %v1080 = vpop.f32.mrb[0].mxu0
        %1081 = vmatprep.mubr.bf16.mxu0 %v869
        %1082 = vmatmul.mubr.bf16.gmra.mrb[0].mxu0 %v868
        %v1083 = vpop.f32.mrb[0].mxu0
        %v1084 = vadd.f32 %v911, %v1083
        %v1085 = vpop.f32.mrb[0].mxu0
        %v1086 = vpop.f32.mrb[0].mxu0
        %v1087 = vadd.f32 %v911, %v1086
        %v1088 = vpop.f32.mrb[0].mxu0
        %1089 = vmatprep.mubr.bf16.mxu0 %v871
        %1090 = vmatmul.mubr.bf16.gmra.mrb[0].mxu0 %v870
        %v1091 = vpop.f32.mrb[0].mxu0
        %v1092 = vadd.f32 %v911, %v1091
        %v1093 = vpop.f32.mrb[0].mxu0
        %v1094 = vpop.f32.mrb[0].mxu0
        %v1095 = vadd.f32 %v911, %v1094
        %v1096 = vpop.f32.mrb[0].mxu0
        %1097 = vmatprep.mubr.bf16.mxu0 %v873
        %1098 = vmatmul.mubr.bf16.gmra.mrb[0].mxu0 %v872
        %v1099 = vpop.f32.mrb[0].mxu0
        %v1100 = vadd.f32 %v911, %v1099
        %v1101 = vpop.f32.mrb[0].mxu0
        %v1102 = vpop.f32.mrb[0].mxu0
        %v1103 = vadd.f32 %v911, %v1102
        %v1104 = vpop.f32.mrb[0].mxu0
        %1105 = vdwg.mxu0
        %v1106 = vmul.f32 %v1044, 0.2
        %v1107 = vmul.f32 %v1047, 0.2
        %v1108 = vmul.f32 %v1052, 0.2
        %v1109 = vmul.f32 %v1055, 0.2
        %v1110 = vmul.f32 %v1060, 0.2
        %v1111 = vmul.f32 %v1063, 0.2
        %v1112 = vmul.f32 %v1068, 0.2
        %v1113 = vmul.f32 %v1071, 0.2
        %v1114 = vmul.f32 %v1076, 0.2
        %v1115 = vmul.f32 %v1079, 0.2
        %v1116 = vmul.f32 %v1084, 0.2
        %v1117 = vmul.f32 %v1087, 0.2
        %v1118 = vmul.f32 %v1092, 0.2
        %v1119 = vmul.f32 %v1095, 0.2
        %v1120 = vmul.f32 %v1100, 0.2
        %v1121 = vmul.f32 %v1103, 0.2
        %v1122 = vmax.f32 %v1044, %v1106
        %v1123 = vmax.f32 %v1047, %v1107
        %v1124 = vmax.f32 %v1052, %v1108
        %v1125 = vmax.f32 %v1055, %v1109
        %v1126 = vmax.f32 %v1060, %v1110
        %v1127 = vmax.f32 %v1063, %v1111
        %v1128 = vmax.f32 %v1068, %v1112
        %v1129 = vmax.f32 %v1071, %v1113
        %v1130 = vmax.f32 %v1076, %v1114
        %v1131 = vmax.f32 %v1079, %v1115
        %v1132 = vmax.f32 %v1084, %v1116
        %v1133 = vmax.f32 %v1087, %v1117
        %v1134 = vmax.f32 %v1092, %v1118
        %v1135 = vmax.f32 %v1095, %v1119
        %v1136 = vmax.f32 %v1100, %v1120
        %v1137 = vmax.f32 %v1103, %v1121
        %v1138 = vpack.c.bf16 %v1123, %v1122
        %v1139 = vpack.c.bf16 %v1125, %v1124
        %v1140 = vpack.c.bf16 %v1127, %v1126
        %v1141 = vpack.c.bf16 %v1129, %v1128
        %v1142 = vpack.c.bf16 %v1131, %v1130
        %v1143 = vpack.c.bf16 %v1133, %v1132
        %v1144 = vpack.c.bf16 %v1135, %v1134
        %v1145 = vpack.c.bf16 %v1137, %v1136
        %v1146 = vld [vmem:[#allocation8] sm:$0xf]
        %v1147 = vld [vmem:[#allocation8 + $0x4] sm:$0xf]
        %v1148 = vld [vmem:[#allocation8 + $0x8] sm:$0xf]
        %v1149 = vld [vmem:[#allocation8 + $0xc] sm:$0xf]
        %v1150 = vld [vmem:[#allocation8 + $0x10] sm:$0xf]
        %v1151 = vld [vmem:[#allocation8 + $0x14] sm:$0xf]
        %v1152 = vld [vmem:[#allocation8 + $0x18] sm:$0xf]
        %v1153 = vld [vmem:[#allocation8 + $0x1c] sm:$0xf]
        %v1154 = vld [vmem:[#allocation8 + $0x20] sm:$0xf]
        %v1155 = vld [vmem:[#allocation8 + $0x24] sm:$0xf]
        %v1156 = vld [vmem:[#allocation8 + $0x28] sm:$0xf]
        %v1157 = vld [vmem:[#allocation8 + $0x2c] sm:$0xf]
        %v1158 = vld [vmem:[#allocation8 + $0x30] sm:$0xf]
        %v1159 = vld [vmem:[#allocation8 + $0x34] sm:$0xf]
        %v1160 = vld [vmem:[#allocation8 + $0x38] sm:$0xf]
        %v1161 = vld [vmem:[#allocation8 + $0x3c] sm:$0xf]
        %v1162 = vld [vmem:[%s6] sm:$0x1]
        %v1164 = vlaneseq
        %v1165 = vshrl.u32 %v1164, 7
        %v1166 = vsub.s32 0, %v1165
        %v1167 = vrot.slane %v1162, %v1166
        %v1185 = vunpack.c.l.b16 %v1146
        %v1186 = vunpack.c.l.b16 %v1147
        %v1187 = vunpack.c.l.b16 %v1148
        %v1188 = vunpack.c.l.b16 %v1149
        %v1189 = vunpack.c.l.b16 %v1150
        %v1190 = vunpack.c.l.b16 %v1151
        %v1191 = vunpack.c.l.b16 %v1152
        %v1192 = vunpack.c.l.b16 %v1153
        %v1193 = vunpack.c.l.b16 %v1154
        %v1194 = vunpack.c.l.b16 %v1155
        %v1195 = vunpack.c.l.b16 %v1156
        %v1196 = vunpack.c.l.b16 %v1157
        %v1197 = vunpack.c.l.b16 %v1158
        %v1198 = vunpack.c.l.b16 %v1159
        %v1199 = vunpack.c.l.b16 %v1160
        %v1200 = vunpack.c.l.b16 %v1161
        %v1201 = vpack.c.b16 %v1186, %v1185
        %v1202 = vpack.c.b16 %v1188, %v1187
        %v1203 = vpack.c.b16 %v1190, %v1189
        %v1204 = vpack.c.b16 %v1192, %v1191
        %v1205 = vpack.c.b16 %v1194, %v1193
        %v1206 = vpack.c.b16 %v1196, %v1195
        %v1207 = vpack.c.b16 %v1198, %v1197
        %v1208 = vpack.c.b16 %v1200, %v1199
        %1217 = vmatprep.subr.bf16.mxu0 0
        %1218 = vmatpush1.bf16.msra.mxu0 %v1201
        %1219 = vmatprep.subr.bf16.mxu0 0
        %1220 = vmatpush1.bf16.msra.mxu0 %v1202
        %1221 = vmatprep.subr.bf16.mxu0 0
        %1222 = vmatpush1.bf16.msra.mxu0 %v1203
        %1223 = vmatprep.subr.bf16.mxu0 0
        %1224 = vmatpush1.bf16.msra.mxu0 %v1204
        %1225 = vmatprep.subr.bf16.mxu0 0
        %1226 = vmatpush1.bf16.msra.mxu0 %v1205
        %1227 = vmatprep.subr.bf16.mxu0 0
        %1228 = vmatpush1.bf16.msra.mxu0 %v1206
        %1229 = vmatprep.subr.bf16.mxu0 0
        %1230 = vmatpush1.bf16.msra.mxu0 %v1207
        %1231 = vmatprep.subr.bf16.mxu0 0
        %1232 = vmatpush1.bf16.msra.mxu0 %v1208
        %1233 = vmatprep.subr.bf16.mxu0 0
        %1234 = vmatpush1.bf16.msra.mxu0 0
        %1235 = vmatprep.subr.bf16.mxu0 0
        %1236 = vmatpush1.bf16.msra.mxu0 0
        %1237 = vmatprep.subr.bf16.mxu0 0
        %1238 = vmatpush1.bf16.msra.mxu0 0
        %1239 = vmatprep.subr.bf16.mxu0 0
        %1240 = vmatpush1.bf16.msra.mxu0 0
        %1241 = vmatprep.subr.bf16.mxu0 0
        %1242 = vmatpush1.bf16.msra.mxu0 0
        %1243 = vmatprep.subr.bf16.mxu0 0
        %1244 = vmatpush1.bf16.msra.mxu0 0
        %1245 = vmatprep.subr.bf16.mxu0 0
        %1246 = vmatpush1.bf16.msra.mxu0 0
        %1247 = vmatprep.subr.bf16.mxu0 0
        %1248 = vmatpush1.bf16.msra.mxu0 0
        %1249 = vmatprep.mubr.bf16.mxu0 0
        %1250 = vmatmul.mubr.bf16.gmra.mrb[0].mxu0 %v1138
        %v1251 = vpop.f32.mrb[0].mxu0
        %v1252 = vadd.f32 %v1167, %v1251
        %v1253 = vpop.f32.mrb[0].mxu0
        %v1254 = vpop.f32.mrb[0].mxu0
        %v1255 = vadd.f32 %v1167, %v1254
        %v1256 = vpop.f32.mrb[0].mxu0
        %1257 = vmatprep.mubr.bf16.mxu0 0
        %1258 = vmatmul.mubr.bf16.gmra.mrb[0].mxu0 %v1139
        %v1259 = vpop.f32.mrb[0].mxu0
        %v1260 = vadd.f32 %v1167, %v1259
        %v1261 = vpop.f32.mrb[0].mxu0
        %v1262 = vpop.f32.mrb[0].mxu0
        %v1263 = vadd.f32 %v1167, %v1262
        %v1264 = vpop.f32.mrb[0].mxu0
        %1265 = vmatprep.mubr.bf16.mxu0 0
        %1266 = vmatmul.mubr.bf16.gmra.mrb[0].mxu0 %v1140
        %v1267 = vpop.f32.mrb[0].mxu0
        %v1268 = vadd.f32 %v1167, %v1267
        %v1269 = vpop.f32.mrb[0].mxu0
        %v1270 = vpop.f32.mrb[0].mxu0
        %v1271 = vadd.f32 %v1167, %v1270
        %v1272 = vpop.f32.mrb[0].mxu0
        %1273 = vmatprep.mubr.bf16.mxu0 0
        %1274 = vmatmul.mubr.bf16.gmra.mrb[0].mxu0 %v1141
        %v1275 = vpop.f32.mrb[0].mxu0
        %v1276 = vadd.f32 %v1167, %v1275
        %v1277 = vpop.f32.mrb[0].mxu0
        %v1278 = vpop.f32.mrb[0].mxu0
        %v1279 = vadd.f32 %v1167, %v1278
        %v1280 = vpop.f32.mrb[0].mxu0
        %1281 = vmatprep.mubr.bf16.mxu0 0
        %1282 = vmatmul.mubr.bf16.gmra.mrb[0].mxu0 %v1142
        %v1283 = vpop.f32.mrb[0].mxu0
        %v1284 = vadd.f32 %v1167, %v1283
        %v1285 = vpop.f32.mrb[0].mxu0
        %v1286 = vpop.f32.mrb[0].mxu0
        %v1287 = vadd.f32 %v1167, %v1286
        %v1288 = vpop.f32.mrb[0].mxu0
        %1289 = vmatprep.mubr.bf16.mxu0 0
        %1290 = vmatmul.mubr.bf16.gmra.mrb[0].mxu0 %v1143
        %v1291 = vpop.f32.mrb[0].mxu0
        %v1292 = vadd.f32 %v1167, %v1291
        %v1293 = vpop.f32.mrb[0].mxu0
        %v1294 = vpop.f32.mrb[0].mxu0
        %v1295 = vadd.f32 %v1167, %v1294
        %v1296 = vpop.f32.mrb[0].mxu0
        %1297 = vmatprep.mubr.bf16.mxu0 0
        %1298 = vmatmul.mubr.bf16.gmra.mrb[0].mxu0 %v1144
        %v1299 = vpop.f32.mrb[0].mxu0
        %v1300 = vadd.f32 %v1167, %v1299
        %v1301 = vpop.f32.mrb[0].mxu0
        %v1302 = vpop.f32.mrb[0].mxu0
        %v1303 = vadd.f32 %v1167, %v1302
        %v1304 = vpop.f32.mrb[0].mxu0
        %1305 = vmatprep.mubr.bf16.mxu0 0
        %1306 = vmatmul.mubr.bf16.gmra.mrb[0].mxu0 %v1145
        %v1307 = vpop.f32.mrb[0].mxu0
        %v1308 = vadd.f32 %v1167, %v1307
        %v1309 = vpop.f32.mrb[0].mxu0
        %v1310 = vpop.f32.mrb[0].mxu0
        %v1311 = vadd.f32 %v1167, %v1310
        %v1312 = vpop.f32.mrb[0].mxu0
        %1313 = vdwg.mxu0
        %v1314 = vpack.c.bf16 %v1255, %v1252
        %v1315 = vpack.c.bf16 %v1263, %v1260
        %v1316 = vpack.c.bf16 %v1271, %v1268
        %v1317 = vpack.c.bf16 %v1279, %v1276
        %v1318 = vpack.c.bf16 %v1287, %v1284
        %v1319 = vpack.c.bf16 %v1295, %v1292
        %v1320 = vpack.c.bf16 %v1303, %v1300
        %v1321 = vpack.c.bf16 %v1311, %v1308
        %v1322 = vld [vmem:[#allocation10] sm:$0xf]
        %v1323 = vld [vmem:[#allocation10 + $0x4] sm:$0xf]
        %v1324 = vld [vmem:[#allocation10 + $0x8] sm:$0xf]
        %v1325 = vld [vmem:[#allocation10 + $0xc] sm:$0xf]
        %v1326 = vld [vmem:[#allocation10 + $0x10] sm:$0xf]
        %v1327 = vld [vmem:[#allocation10 + $0x14] sm:$0xf]
        %v1328 = vld [vmem:[#allocation10 + $0x18] sm:$0xf]
        %v1329 = vld [vmem:[#allocation10 + $0x1c] sm:$0xf]
        %v1330 = vld [vmem:[#allocation10 + $0x20] sm:$0xf]
        %v1331 = vld [vmem:[#allocation10 + $0x24] sm:$0xf]
        %v1332 = vld [vmem:[#allocation10 + $0x28] sm:$0xf]
        %v1333 = vld [vmem:[#allocation10 + $0x2c] sm:$0xf]
        %v1334 = vld [vmem:[#allocation10 + $0x30] sm:$0xf]
        %v1335 = vld [vmem:[#allocation10 + $0x34] sm:$0xf]
        %v1336 = vld [vmem:[#allocation10 + $0x38] sm:$0xf]
        %v1337 = vld [vmem:[#allocation10 + $0x3c] sm:$0xf]
        %v1338 = vld [vmem:[%s8] sm:$0x1]
        %v1340 = vlaneseq
        %v1341 = vshrl.u32 %v1340, 7
        %v1342 = vsub.s32 0, %v1341
        %v1343 = vrot.slane %v1338, %v1342
        %v1361 = vunpack.c.l.b16 %v1322
        %v1362 = vunpack.c.l.b16 %v1323
        %v1363 = vunpack.c.l.b16 %v1324
        %v1364 = vunpack.c.l.b16 %v1325
        %v1365 = vunpack.c.l.b16 %v1326
        %v1366 = vunpack.c.l.b16 %v1327
        %v1367 = vunpack.c.l.b16 %v1328
        %v1368 = vunpack.c.l.b16 %v1329
        %v1369 = vunpack.c.l.b16 %v1330
        %v1370 = vunpack.c.l.b16 %v1331
        %v1371 = vunpack.c.l.b16 %v1332
        %v1372 = vunpack.c.l.b16 %v1333
        %v1373 = vunpack.c.l.b16 %v1334
        %v1374 = vunpack.c.l.b16 %v1335
        %v1375 = vunpack.c.l.b16 %v1336
        %v1376 = vunpack.c.l.b16 %v1337
        %v1377 = vpack.c.b16 %v1362, %v1361
        %v1378 = vpack.c.b16 %v1364, %v1363
        %v1379 = vpack.c.b16 %v1366, %v1365
        %v1380 = vpack.c.b16 %v1368, %v1367
        %v1381 = vpack.c.b16 %v1370, %v1369
        %v1382 = vpack.c.b16 %v1372, %v1371
        %v1383 = vpack.c.b16 %v1374, %v1373
        %v1384 = vpack.c.b16 %v1376, %v1375
        %1393 = vmatprep.subr.bf16.mxu0 0
        %1394 = vmatpush1.bf16.msra.mxu0 %v1377
        %1395 = vmatprep.subr.bf16.mxu0 0
        %1396 = vmatpush1.bf16.msra.mxu0 %v1378
        %1397 = vmatprep.subr.bf16.mxu0 0
        %1398 = vmatpush1.bf16.msra.mxu0 %v1379
        %1399 = vmatprep.subr.bf16.mxu0 0
        %1400 = vmatpush1.bf16.msra.mxu0 %v1380
        %1401 = vmatprep.subr.bf16.mxu0 0
        %1402 = vmatpush1.bf16.msra.mxu0 %v1381
        %1403 = vmatprep.subr.bf16.mxu0 0
        %1404 = vmatpush1.bf16.msra.mxu0 %v1382
        %1405 = vmatprep.subr.bf16.mxu0 0
        %1406 = vmatpush1.bf16.msra.mxu0 %v1383
        %1407 = vmatprep.subr.bf16.mxu0 0
        %1408 = vmatpush1.bf16.msra.mxu0 %v1384
        %1409 = vmatprep.subr.bf16.mxu0 0
        %1410 = vmatpush1.bf16.msra.mxu0 0
        %1411 = vmatprep.subr.bf16.mxu0 0
        %1412 = vmatpush1.bf16.msra.mxu0 0
        %1413 = vmatprep.subr.bf16.mxu0 0
        %1414 = vmatpush1.bf16.msra.mxu0 0
        %1415 = vmatprep.subr.bf16.mxu0 0
        %1416 = vmatpush1.bf16.msra.mxu0 0
        %1417 = vmatprep.subr.bf16.mxu0 0
        %1418 = vmatpush1.bf16.msra.mxu0 0
        %1419 = vmatprep.subr.bf16.mxu0 0
        %1420 = vmatpush1.bf16.msra.mxu0 0
        %1421 = vmatprep.subr.bf16.mxu0 0
        %1422 = vmatpush1.bf16.msra.mxu0 0
        %1423 = vmatprep.subr.bf16.mxu0 0
        %1424 = vmatpush1.bf16.msra.mxu0 0
        %1425 = vmatprep.mubr.bf16.mxu0 0
        %1426 = vmatmul.mubr.bf16.gmra.mrb[0].mxu0 %v1314
        %v1427 = vpop.f32.mrb[0].mxu0
        %v1428 = vadd.f32 %v1343, %v1427
        %v1429 = vpop.f32.mrb[0].mxu0
        %v1430 = vpop.f32.mrb[0].mxu0
        %v1431 = vadd.f32 %v1343, %v1430
        %v1432 = vpop.f32.mrb[0].mxu0
        %1433 = vmatprep.mubr.bf16.mxu0 0
        %1434 = vmatmul.mubr.bf16.gmra.mrb[0].mxu0 %v1315
        %v1435 = vpop.f32.mrb[0].mxu0
        %v1436 = vadd.f32 %v1343, %v1435
        %v1437 = vpop.f32.mrb[0].mxu0
        %v1438 = vpop.f32.mrb[0].mxu0
        %v1439 = vadd.f32 %v1343, %v1438
        %v1440 = vpop.f32.mrb[0].mxu0
        %1441 = vmatprep.mubr.bf16.mxu0 0
        %1442 = vmatmul.mubr.bf16.gmra.mrb[0].mxu0 %v1316
        %v1443 = vpop.f32.mrb[0].mxu0
        %v1444 = vadd.f32 %v1343, %v1443
        %v1445 = vpop.f32.mrb[0].mxu0
        %v1446 = vpop.f32.mrb[0].mxu0
        %v1447 = vadd.f32 %v1343, %v1446
        %v1448 = vpop.f32.mrb[0].mxu0
        %1449 = vmatprep.mubr.bf16.mxu0 0
        %1450 = vmatmul.mubr.bf16.gmra.mrb[0].mxu0 %v1317
        %v1451 = vpop.f32.mrb[0].mxu0
        %v1452 = vadd.f32 %v1343, %v1451
        %v1453 = vpop.f32.mrb[0].mxu0
        %v1454 = vpop.f32.mrb[0].mxu0
        %v1455 = vadd.f32 %v1343, %v1454
        %v1456 = vpop.f32.mrb[0].mxu0
        %1457 = vmatprep.mubr.bf16.mxu0 0
        %1458 = vmatmul.mubr.bf16.gmra.mrb[0].mxu0 %v1318
        %v1459 = vpop.f32.mrb[0].mxu0
        %v1460 = vadd.f32 %v1343, %v1459
        %v1461 = vpop.f32.mrb[0].mxu0
        %v1462 = vpop.f32.mrb[0].mxu0
        %v1463 = vadd.f32 %v1343, %v1462
        %v1464 = vpop.f32.mrb[0].mxu0
        %1465 = vmatprep.mubr.bf16.mxu0 0
        %1466 = vmatmul.mubr.bf16.gmra.mrb[0].mxu0 %v1319
        %v1467 = vpop.f32.mrb[0].mxu0
        %v1468 = vadd.f32 %v1343, %v1467
        %v1469 = vpop.f32.mrb[0].mxu0
        %v1470 = vpop.f32.mrb[0].mxu0
        %v1471 = vadd.f32 %v1343, %v1470
        %v1472 = vpop.f32.mrb[0].mxu0
        %1473 = vmatprep.mubr.bf16.mxu0 0
        %1474 = vmatmul.mubr.bf16.gmra.mrb[0].mxu0 %v1320
        %v1475 = vpop.f32.mrb[0].mxu0
        %v1476 = vadd.f32 %v1343, %v1475
        %v1477 = vpop.f32.mrb[0].mxu0
        %v1478 = vpop.f32.mrb[0].mxu0
        %v1479 = vadd.f32 %v1343, %v1478
        %v1480 = vpop.f32.mrb[0].mxu0
        %1481 = vmatprep.mubr.bf16.mxu0 0
        %1482 = vmatmul.mubr.bf16.gmra.mrb[0].mxu0 %v1321
        %v1483 = vpop.f32.mrb[0].mxu0
        %v1484 = vadd.f32 %v1343, %v1483
        %v1485 = vpop.f32.mrb[0].mxu0
        %v1486 = vpop.f32.mrb[0].mxu0
        %v1487 = vadd.f32 %v1343, %v1486
        %v1488 = vpop.f32.mrb[0].mxu0
        %1489 = vdwg.mxu0
        %v1490 = vmul.f32 %v1428, 0.2
        %v1491 = vmul.f32 %v1431, 0.2
        %v1492 = vmul.f32 %v1436, 0.2
        %v1493 = vmul.f32 %v1439, 0.2
        %v1494 = vmul.f32 %v1444, 0.2
        %v1495 = vmul.f32 %v1447, 0.2
        %v1496 = vmul.f32 %v1452, 0.2
        %v1497 = vmul.f32 %v1455, 0.2
        %v1498 = vmul.f32 %v1460, 0.2
        %v1499 = vmul.f32 %v1463, 0.2
        %v1500 = vmul.f32 %v1468, 0.2
        %v1501 = vmul.f32 %v1471, 0.2
        %v1502 = vmul.f32 %v1476, 0.2
        %v1503 = vmul.f32 %v1479, 0.2
        %v1504 = vmul.f32 %v1484, 0.2
        %v1505 = vmul.f32 %v1487, 0.2
        %v1506 = vmax.f32 %v1428, %v1490
        %v1507 = vmax.f32 %v1431, %v1491
        %v1508 = vmax.f32 %v1436, %v1492
        %v1509 = vmax.f32 %v1439, %v1493
        %v1510 = vmax.f32 %v1444, %v1494
        %v1511 = vmax.f32 %v1447, %v1495
        %v1512 = vmax.f32 %v1452, %v1496
        %v1513 = vmax.f32 %v1455, %v1497
        %v1514 = vmax.f32 %v1460, %v1498
        %v1515 = vmax.f32 %v1463, %v1499
        %v1516 = vmax.f32 %v1468, %v1500
        %v1517 = vmax.f32 %v1471, %v1501
        %v1518 = vmax.f32 %v1476, %v1502
        %v1519 = vmax.f32 %v1479, %v1503
        %v1520 = vmax.f32 %v1484, %v1504
        %v1521 = vmax.f32 %v1487, %v1505
        %v1522 = vpack.c.bf16 %v1507, %v1506
        %v1523 = vpack.c.bf16 %v1509, %v1508
        %v1524 = vpack.c.bf16 %v1511, %v1510
        %v1525 = vpack.c.bf16 %v1513, %v1512
        %v1526 = vpack.c.bf16 %v1515, %v1514
        %v1527 = vpack.c.bf16 %v1517, %v1516
        %v1528 = vpack.c.bf16 %v1519, %v1518
        %v1529 = vpack.c.bf16 %v1521, %v1520
        %v1530 = vld [vmem:[#allocation11] sm:$0xff]
        %v1531 = vld [vmem:[#allocation11 + $0x8] sm:$0xff]
        %v1532 = vld [vmem:[#allocation11 + $0x10] sm:$0xff]
        %v1533 = vld [vmem:[#allocation11 + $0x18] sm:$0xff]
        %v1534 = vld [vmem:[#allocation11 + $0x20] sm:$0xff]
        %v1535 = vld [vmem:[#allocation11 + $0x28] sm:$0xff]
        %v1536 = vld [vmem:[#allocation11 + $0x30] sm:$0xff]
        %v1537 = vld [vmem:[#allocation11 + $0x38] sm:$0xff]
        %v1538 = vld [vmem:[#allocation11 + $0x40] sm:$0xff]
        %v1539 = vld [vmem:[#allocation11 + $0x48] sm:$0xff]
        %v1540 = vld [vmem:[#allocation11 + $0x50] sm:$0xff]
        %v1541 = vld [vmem:[#allocation11 + $0x58] sm:$0xff]
        %v1542 = vld [vmem:[#allocation11 + $0x60] sm:$0xff]
        %v1543 = vld [vmem:[#allocation11 + $0x68] sm:$0xff]
        %v1544 = vld [vmem:[#allocation11 + $0x70] sm:$0xff]
        %v1545 = vld [vmem:[#allocation11 + $0x78] sm:$0xff]
        %v1546 = vld [vmem:[%s10] sm:$0x3]
        %v1548 = vlaneseq
        %v1549 = vshrl.u32 %v1548, 7
        %v1550 = vsub.s32 0, %v1549
        %v1551 = vrot.slane %v1546, %v1550
        %v1552 = vlaneseq
        %v1553 = vshrl.u32 %v1552, 7
        %v1554 = vsub.s32 1, %v1553
        %v1555 = vrot.slane %v1546, %v1554
        %v1574 = vunpack.c.l.b16 %v1530
        %v1575 = vunpack.c.h.b16 %v1530
        %v1576 = vunpack.c.l.b16 %v1531
        %v1577 = vunpack.c.h.b16 %v1531
        %v1578 = vunpack.c.l.b16 %v1532
        %v1579 = vunpack.c.h.b16 %v1532
        %v1580 = vunpack.c.l.b16 %v1533
        %v1581 = vunpack.c.h.b16 %v1533
        %v1582 = vunpack.c.l.b16 %v1534
        %v1583 = vunpack.c.h.b16 %v1534
        %v1584 = vunpack.c.l.b16 %v1535
        %v1585 = vunpack.c.h.b16 %v1535
        %v1586 = vunpack.c.l.b16 %v1536
        %v1587 = vunpack.c.h.b16 %v1536
        %v1588 = vunpack.c.l.b16 %v1537
        %v1589 = vunpack.c.h.b16 %v1537
        %v1590 = vunpack.c.l.b16 %v1538
        %v1591 = vunpack.c.h.b16 %v1538
        %v1592 = vunpack.c.l.b16 %v1539
        %v1593 = vunpack.c.h.b16 %v1539
        %v1594 = vunpack.c.l.b16 %v1540
        %v1595 = vunpack.c.h.b16 %v1540
        %v1596 = vunpack.c.l.b16 %v1541
        %v1597 = vunpack.c.h.b16 %v1541
        %v1598 = vunpack.c.l.b16 %v1542
        %v1599 = vunpack.c.h.b16 %v1542
        %v1600 = vunpack.c.l.b16 %v1543
        %v1601 = vunpack.c.h.b16 %v1543
        %v1602 = vunpack.c.l.b16 %v1544
        %v1603 = vunpack.c.h.b16 %v1544
        %v1604 = vunpack.c.l.b16 %v1545
        %v1605 = vunpack.c.h.b16 %v1545
        %v1606 = vpack.c.b16 %v1576, %v1574
        %v1607 = vpack.c.b16 %v1577, %v1575
        %v1608 = vpack.c.b16 %v1580, %v1578
        %v1609 = vpack.c.b16 %v1581, %v1579
        %v1610 = vpack.c.b16 %v1584, %v1582
        %v1611 = vpack.c.b16 %v1585, %v1583
        %v1612 = vpack.c.b16 %v1588, %v1586
        %v1613 = vpack.c.b16 %v1589, %v1587
        %v1614 = vpack.c.b16 %v1592, %v1590
        %v1615 = vpack.c.b16 %v1593, %v1591
        %v1616 = vpack.c.b16 %v1596, %v1594
        %v1617 = vpack.c.b16 %v1597, %v1595
        %v1618 = vpack.c.b16 %v1600, %v1598
        %v1619 = vpack.c.b16 %v1601, %v1599
        %v1620 = vpack.c.b16 %v1604, %v1602
        %v1621 = vpack.c.b16 %v1605, %v1603
        %1638 = vmatprep.subr.bf16.mxu0 %v1607
        %1639 = vmatpush1.bf16.msra.mxu0 %v1606
        %1640 = vmatprep.subr.bf16.mxu0 %v1609
        %1641 = vmatpush1.bf16.msra.mxu0 %v1608
        %1642 = vmatprep.subr.bf16.mxu0 %v1611
        %1643 = vmatpush1.bf16.msra.mxu0 %v1610
        %1644 = vmatprep.subr.bf16.mxu0 %v1613
        %1645 = vmatpush1.bf16.msra.mxu0 %v1612
        %1646 = vmatprep.subr.bf16.mxu0 %v1615
        %1647 = vmatpush1.bf16.msra.mxu0 %v1614
        %1648 = vmatprep.subr.bf16.mxu0 %v1617
        %1649 = vmatpush1.bf16.msra.mxu0 %v1616
        %1650 = vmatprep.subr.bf16.mxu0 %v1619
        %1651 = vmatpush1.bf16.msra.mxu0 %v1618
        %1652 = vmatprep.subr.bf16.mxu0 %v1621
        %1653 = vmatpush1.bf16.msra.mxu0 %v1620
        %1654 = vmatprep.subr.bf16.mxu0 0
        %1655 = vmatpush1.bf16.msra.mxu0 0
        %1656 = vmatprep.subr.bf16.mxu0 0
        %1657 = vmatpush1.bf16.msra.mxu0 0
        %1658 = vmatprep.subr.bf16.mxu0 0
        %1659 = vmatpush1.bf16.msra.mxu0 0
        %1660 = vmatprep.subr.bf16.mxu0 0
        %1661 = vmatpush1.bf16.msra.mxu0 0
        %1662 = vmatprep.subr.bf16.mxu0 0
        %1663 = vmatpush1.bf16.msra.mxu0 0
        %1664 = vmatprep.subr.bf16.mxu0 0
        %1665 = vmatpush1.bf16.msra.mxu0 0
        %1666 = vmatprep.subr.bf16.mxu0 0
        %1667 = vmatpush1.bf16.msra.mxu0 0
        %1668 = vmatprep.subr.bf16.mxu0 0
        %1669 = vmatpush1.bf16.msra.mxu0 0
        %1670 = vmatprep.mubr.bf16.mxu0 0
        %1671 = vmatmul.mubr.bf16.gmra.mrb[0].mxu0 %v1522
        %v1672 = vpop.f32.mrb[0].mxu0
        %v1673 = vadd.f32 %v1551, %v1672
        %v1674 = vpop.f32.mrb[0].mxu0
        %v1675 = vadd.f32 %v1555, %v1674
        %v1676 = vpop.f32.mrb[0].mxu0
        %v1677 = vadd.f32 %v1551, %v1676
        %v1678 = vpop.f32.mrb[0].mxu0
        %v1679 = vadd.f32 %v1555, %v1678
        %1680 = vmatprep.mubr.bf16.mxu0 0
        %1681 = vmatmul.mubr.bf16.gmra.mrb[0].mxu0 %v1523
        %v1682 = vpop.f32.mrb[0].mxu0
        %v1683 = vadd.f32 %v1551, %v1682
        %v1684 = vpop.f32.mrb[0].mxu0
        %v1685 = vadd.f32 %v1555, %v1684
        %v1686 = vpop.f32.mrb[0].mxu0
        %v1687 = vadd.f32 %v1551, %v1686
        %v1688 = vpop.f32.mrb[0].mxu0
        %v1689 = vadd.f32 %v1555, %v1688
        %1690 = vmatprep.mubr.bf16.mxu0 0
        %1691 = vmatmul.mubr.bf16.gmra.mrb[0].mxu0 %v1524
        %v1692 = vpop.f32.mrb[0].mxu0
        %v1693 = vadd.f32 %v1551, %v1692
        %v1694 = vpop.f32.mrb[0].mxu0
        %v1695 = vadd.f32 %v1555, %v1694
        %v1696 = vpop.f32.mrb[0].mxu0
        %v1697 = vadd.f32 %v1551, %v1696
        %v1698 = vpop.f32.mrb[0].mxu0
        %v1699 = vadd.f32 %v1555, %v1698
        %1700 = vmatprep.mubr.bf16.mxu0 0
        %1701 = vmatmul.mubr.bf16.gmra.mrb[0].mxu0 %v1525
        %v1702 = vpop.f32.mrb[0].mxu0
        %v1703 = vadd.f32 %v1551, %v1702
        %v1704 = vpop.f32.mrb[0].mxu0
        %v1705 = vadd.f32 %v1555, %v1704
        %v1706 = vpop.f32.mrb[0].mxu0
        %v1707 = vadd.f32 %v1551, %v1706
        %v1708 = vpop.f32.mrb[0].mxu0
        %v1709 = vadd.f32 %v1555, %v1708
        %1710 = vmatprep.mubr.bf16.mxu0 0
        %1711 = vmatmul.mubr.bf16.gmra.mrb[0].mxu0 %v1526
        %v1712 = vpop.f32.mrb[0].mxu0
        %v1713 = vadd.f32 %v1551, %v1712
        %v1714 = vpop.f32.mrb[0].mxu0
        %v1715 = vadd.f32 %v1555, %v1714
        %v1716 = vpop.f32.mrb[0].mxu0
        %v1717 = vadd.f32 %v1551, %v1716
        %v1718 = vpop.f32.mrb[0].mxu0
        %v1719 = vadd.f32 %v1555, %v1718
        %1720 = vmatprep.mubr.bf16.mxu0 0
        %1721 = vmatmul.mubr.bf16.gmra.mrb[0].mxu0 %v1527
        %v1722 = vpop.f32.mrb[0].mxu0
        %v1723 = vadd.f32 %v1551, %v1722
        %v1724 = vpop.f32.mrb[0].mxu0
        %v1725 = vadd.f32 %v1555, %v1724
        %v1726 = vpop.f32.mrb[0].mxu0
        %v1727 = vadd.f32 %v1551, %v1726
        %v1728 = vpop.f32.mrb[0].mxu0
        %v1729 = vadd.f32 %v1555, %v1728
        %1730 = vmatprep.mubr.bf16.mxu0 0
        %1731 = vmatmul.mubr.bf16.gmra.mrb[0].mxu0 %v1528
        %v1732 = vpop.f32.mrb[0].mxu0
        %v1733 = vadd.f32 %v1551, %v1732
        %v1734 = vpop.f32.mrb[0].mxu0
        %v1735 = vadd.f32 %v1555, %v1734
        %v1736 = vpop.f32.mrb[0].mxu0
        %v1737 = vadd.f32 %v1551, %v1736
        %v1738 = vpop.f32.mrb[0].mxu0
        %v1739 = vadd.f32 %v1555, %v1738
        %1740 = vmatprep.mubr.bf16.mxu0 0
        %1741 = vmatmul.mubr.bf16.gmra.mrb[0].mxu0 %v1529
        %v1742 = vpop.f32.mrb[0].mxu0
        %v1743 = vadd.f32 %v1551, %v1742
        %v1744 = vpop.f32.mrb[0].mxu0
        %v1745 = vadd.f32 %v1555, %v1744
        %v1746 = vpop.f32.mrb[0].mxu0
        %v1747 = vadd.f32 %v1551, %v1746
        %v1748 = vpop.f32.mrb[0].mxu0
        %v1749 = vadd.f32 %v1555, %v1748
        %1750 = vdwg.mxu0
        %v1751 = vmul.f32 %v1673, 0.2
        %v1752 = vmul.f32 %v1675, 0.2
        %v1753 = vmul.f32 %v1677, 0.2
        %v1754 = vmul.f32 %v1679, 0.2
        %v1755 = vmul.f32 %v1683, 0.2
        %v1756 = vmul.f32 %v1685, 0.2
        %v1757 = vmul.f32 %v1687, 0.2
        %v1758 = vmul.f32 %v1689, 0.2
        %v1759 = vmul.f32 %v1693, 0.2
        %v1760 = vmul.f32 %v1695, 0.2
        %v1761 = vmul.f32 %v1697, 0.2
        %v1762 = vmul.f32 %v1699, 0.2
        %v1763 = vmul.f32 %v1703, 0.2
        %v1764 = vmul.f32 %v1705, 0.2
        %v1765 = vmul.f32 %v1707, 0.2
        %v1766 = vmul.f32 %v1709, 0.2
        %v1767 = vmul.f32 %v1713, 0.2
        %v1768 = vmul.f32 %v1715, 0.2
        %v1769 = vmul.f32 %v1717, 0.2
        %v1770 = vmul.f32 %v1719, 0.2
        %v1771 = vmul.f32 %v1723, 0.2
        %v1772 = vmul.f32 %v1725, 0.2
        %v1773 = vmul.f32 %v1727, 0.2
        %v1774 = vmul.f32 %v1729, 0.2
        %v1775 = vmul.f32 %v1733, 0.2
        %v1776 = vmul.f32 %v1735, 0.2
        %v1777 = vmul.f32 %v1737, 0.2
        %v1778 = vmul.f32 %v1739, 0.2
        %v1779 = vmul.f32 %v1743, 0.2
        %v1780 = vmul.f32 %v1745, 0.2
        %v1781 = vmul.f32 %v1747, 0.2
        %v1782 = vmul.f32 %v1749, 0.2
        %v1783 = vmax.f32 %v1673, %v1751
        %v1784 = vmax.f32 %v1675, %v1752
        %v1785 = vmax.f32 %v1677, %v1753
        %v1786 = vmax.f32 %v1679, %v1754
        %v1787 = vmax.f32 %v1683, %v1755
        %v1788 = vmax.f32 %v1685, %v1756
        %v1789 = vmax.f32 %v1687, %v1757
        %v1790 = vmax.f32 %v1689, %v1758
        %v1791 = vmax.f32 %v1693, %v1759
        %v1792 = vmax.f32 %v1695, %v1760
        %v1793 = vmax.f32 %v1697, %v1761
        %v1794 = vmax.f32 %v1699, %v1762
        %v1795 = vmax.f32 %v1703, %v1763
        %v1796 = vmax.f32 %v1705, %v1764
        %v1797 = vmax.f32 %v1707, %v1765
        %v1798 = vmax.f32 %v1709, %v1766
        %v1799 = vmax.f32 %v1713, %v1767
        %v1800 = vmax.f32 %v1715, %v1768
        %v1801 = vmax.f32 %v1717, %v1769
        %v1802 = vmax.f32 %v1719, %v1770
        %v1803 = vmax.f32 %v1723, %v1771
        %v1804 = vmax.f32 %v1725, %v1772
        %v1805 = vmax.f32 %v1727, %v1773
        %v1806 = vmax.f32 %v1729, %v1774
        %v1807 = vmax.f32 %v1733, %v1775
        %v1808 = vmax.f32 %v1735, %v1776
        %v1809 = vmax.f32 %v1737, %v1777
        %v1810 = vmax.f32 %v1739, %v1778
        %v1811 = vmax.f32 %v1743, %v1779
        %v1812 = vmax.f32 %v1745, %v1780
        %v1813 = vmax.f32 %v1747, %v1781
        %v1814 = vmax.f32 %v1749, %v1782
        %v1815 = vpack.c.bf16 %v1785, %v1783
        %v1816 = vpack.c.bf16 %v1786, %v1784
        %v1817 = vpack.c.bf16 %v1789, %v1787
        %v1818 = vpack.c.bf16 %v1790, %v1788
        %v1819 = vpack.c.bf16 %v1793, %v1791
        %v1820 = vpack.c.bf16 %v1794, %v1792
        %v1821 = vpack.c.bf16 %v1797, %v1795
        %v1822 = vpack.c.bf16 %v1798, %v1796
        %v1823 = vpack.c.bf16 %v1801, %v1799
        %v1824 = vpack.c.bf16 %v1802, %v1800
        %v1825 = vpack.c.bf16 %v1805, %v1803
        %v1826 = vpack.c.bf16 %v1806, %v1804
        %v1827 = vpack.c.bf16 %v1809, %v1807
        %v1828 = vpack.c.bf16 %v1810, %v1808
        %v1829 = vpack.c.bf16 %v1813, %v1811
        %v1830 = vpack.c.bf16 %v1814, %v1812
        %v1831 = vld [vmem:[#allocation13] sm:$0xf]
        %v1832 = vld [vmem:[#allocation13 + $0x4] sm:$0xf]
        %v1833 = vld [vmem:[#allocation13 + $0x8] sm:$0xf]
        %v1834 = vld [vmem:[#allocation13 + $0xc] sm:$0xf]
        %v1835 = vld [vmem:[#allocation13 + $0x10] sm:$0xf]
        %v1836 = vld [vmem:[#allocation13 + $0x14] sm:$0xf]
        %v1837 = vld [vmem:[#allocation13 + $0x18] sm:$0xf]
        %v1838 = vld [vmem:[#allocation13 + $0x1c] sm:$0xf]
        %v1839 = vld [vmem:[#allocation13 + $0x20] sm:$0xf]
        %v1840 = vld [vmem:[#allocation13 + $0x24] sm:$0xf]
        %v1841 = vld [vmem:[#allocation13 + $0x28] sm:$0xf]
        %v1842 = vld [vmem:[#allocation13 + $0x2c] sm:$0xf]
        %v1843 = vld [vmem:[#allocation13 + $0x30] sm:$0xf]
        %v1844 = vld [vmem:[#allocation13 + $0x34] sm:$0xf]
        %v1845 = vld [vmem:[#allocation13 + $0x38] sm:$0xf]
        %v1846 = vld [vmem:[#allocation13 + $0x3c] sm:$0xf]
        %v1847 = vld [vmem:[#allocation13 + $0x40] sm:$0xf]
        %v1848 = vld [vmem:[#allocation13 + $0x44] sm:$0xf]
        %v1849 = vld [vmem:[#allocation13 + $0x48] sm:$0xf]
        %v1850 = vld [vmem:[#allocation13 + $0x4c] sm:$0xf]
        %v1851 = vld [vmem:[#allocation13 + $0x50] sm:$0xf]
        %v1852 = vld [vmem:[#allocation13 + $0x54] sm:$0xf]
        %v1853 = vld [vmem:[#allocation13 + $0x58] sm:$0xf]
        %v1854 = vld [vmem:[#allocation13 + $0x5c] sm:$0xf]
        %v1855 = vld [vmem:[#allocation13 + $0x60] sm:$0xf]
        %v1856 = vld [vmem:[#allocation13 + $0x64] sm:$0xf]
        %v1857 = vld [vmem:[#allocation13 + $0x68] sm:$0xf]
        %v1858 = vld [vmem:[#allocation13 + $0x6c] sm:$0xf]
        %v1859 = vld [vmem:[#allocation13 + $0x70] sm:$0xf]
        %v1860 = vld [vmem:[#allocation13 + $0x74] sm:$0xf]
        %v1861 = vld [vmem:[#allocation13 + $0x78] sm:$0xf]
        %v1862 = vld [vmem:[#allocation13 + $0x7c] sm:$0xf]
        %v1863 = vld [vmem:[%s12] sm:$0x1]
        %v1865 = vlaneseq
        %v1866 = vshrl.u32 %v1865, 7
        %v1867 = vsub.s32 0, %v1866
        %v1868 = vrot.slane %v1863, %v1867
        %v1902 = vunpack.c.l.b16 %v1831
        %v1903 = vunpack.c.l.b16 %v1832
        %v1904 = vunpack.c.l.b16 %v1833
        %v1905 = vunpack.c.l.b16 %v1834
        %v1906 = vunpack.c.l.b16 %v1835
        %v1907 = vunpack.c.l.b16 %v1836
        %v1908 = vunpack.c.l.b16 %v1837
        %v1909 = vunpack.c.l.b16 %v1838
        %v1910 = vunpack.c.l.b16 %v1839
        %v1911 = vunpack.c.l.b16 %v1840
        %v1912 = vunpack.c.l.b16 %v1841
        %v1913 = vunpack.c.l.b16 %v1842
        %v1914 = vunpack.c.l.b16 %v1843
        %v1915 = vunpack.c.l.b16 %v1844
        %v1916 = vunpack.c.l.b16 %v1845
        %v1917 = vunpack.c.l.b16 %v1846
        %v1918 = vunpack.c.l.b16 %v1847
        %v1919 = vunpack.c.l.b16 %v1848
        %v1920 = vunpack.c.l.b16 %v1849
        %v1921 = vunpack.c.l.b16 %v1850
        %v1922 = vunpack.c.l.b16 %v1851
        %v1923 = vunpack.c.l.b16 %v1852
        %v1924 = vunpack.c.l.b16 %v1853
        %v1925 = vunpack.c.l.b16 %v1854
        %v1926 = vunpack.c.l.b16 %v1855
        %v1927 = vunpack.c.l.b16 %v1856
        %v1928 = vunpack.c.l.b16 %v1857
        %v1929 = vunpack.c.l.b16 %v1858
        %v1930 = vunpack.c.l.b16 %v1859
        %v1931 = vunpack.c.l.b16 %v1860
        %v1932 = vunpack.c.l.b16 %v1861
        %v1933 = vunpack.c.l.b16 %v1862
        %v1934 = vpack.c.b16 %v1903, %v1902
        %v1935 = vpack.c.b16 %v1905, %v1904
        %v1936 = vpack.c.b16 %v1907, %v1906
        %v1937 = vpack.c.b16 %v1909, %v1908
        %v1938 = vpack.c.b16 %v1911, %v1910
        %v1939 = vpack.c.b16 %v1913, %v1912
        %v1940 = vpack.c.b16 %v1915, %v1914
        %v1941 = vpack.c.b16 %v1917, %v1916
        %v1942 = vpack.c.b16 %v1919, %v1918
        %v1943 = vpack.c.b16 %v1921, %v1920
        %v1944 = vpack.c.b16 %v1923, %v1922
        %v1945 = vpack.c.b16 %v1925, %v1924
        %v1946 = vpack.c.b16 %v1927, %v1926
        %v1947 = vpack.c.b16 %v1929, %v1928
        %v1948 = vpack.c.b16 %v1931, %v1930
        %v1949 = vpack.c.b16 %v1933, %v1932
        %1966 = vmatprep.subr.bf16.mxu0 0
        %1967 = vmatpush1.bf16.msra.mxu0 %v1934
        %1968 = vmatprep.subr.bf16.mxu0 0
        %1969 = vmatpush1.bf16.msra.mxu0 %v1935
        %1970 = vmatprep.subr.bf16.mxu0 0
        %1971 = vmatpush1.bf16.msra.mxu0 %v1936
        %1972 = vmatprep.subr.bf16.mxu0 0
        %1973 = vmatpush1.bf16.msra.mxu0 %v1937
        %1974 = vmatprep.subr.bf16.mxu0 0
        %1975 = vmatpush1.bf16.msra.mxu0 %v1938
        %1976 = vmatprep.subr.bf16.mxu0 0
        %1977 = vmatpush1.bf16.msra.mxu0 %v1939
        %1978 = vmatprep.subr.bf16.mxu0 0
        %1979 = vmatpush1.bf16.msra.mxu0 %v1940
        %1980 = vmatprep.subr.bf16.mxu0 0
        %1981 = vmatpush1.bf16.msra.mxu0 %v1941
        %1982 = vmatprep.subr.bf16.mxu0 0
        %1983 = vmatpush1.bf16.msra.mxu0 %v1942
        %1984 = vmatprep.subr.bf16.mxu0 0
        %1985 = vmatpush1.bf16.msra.mxu0 %v1943
        %1986 = vmatprep.subr.bf16.mxu0 0
        %1987 = vmatpush1.bf16.msra.mxu0 %v1944
        %1988 = vmatprep.subr.bf16.mxu0 0
        %1989 = vmatpush1.bf16.msra.mxu0 %v1945
        %1990 = vmatprep.subr.bf16.mxu0 0
        %1991 = vmatpush1.bf16.msra.mxu0 %v1946
        %1992 = vmatprep.subr.bf16.mxu0 0
        %1993 = vmatpush1.bf16.msra.mxu0 %v1947
        %1994 = vmatprep.subr.bf16.mxu0 0
        %1995 = vmatpush1.bf16.msra.mxu0 %v1948
        %1996 = vmatprep.subr.bf16.mxu0 0
        %1997 = vmatpush1.bf16.msra.mxu0 %v1949
        %1998 = vmatprep.mubr.bf16.mxu0 %v1816
        %1999 = vmatmul.mubr.bf16.gmra.mrb[0].mxu0 %v1815
        %v2000 = vpop.f32.mrb[0].mxu0
        %v2001 = vadd.f32 %v1868, %v2000
        %v2002 = vpop.f32.mrb[0].mxu0
        %v2003 = vpop.f32.mrb[0].mxu0
        %v2004 = vadd.f32 %v1868, %v2003
        %v2005 = vpop.f32.mrb[0].mxu0
        %2006 = vmatprep.mubr.bf16.mxu0 %v1818
        %2007 = vmatmul.mubr.bf16.gmra.mrb[0].mxu0 %v1817
        %v2008 = vpop.f32.mrb[0].mxu0
        %v2009 = vadd.f32 %v1868, %v2008
        %v2010 = vpop.f32.mrb[0].mxu0
        %v2011 = vpop.f32.mrb[0].mxu0
        %v2012 = vadd.f32 %v1868, %v2011
        %v2013 = vpop.f32.mrb[0].mxu0
        %2014 = vmatprep.mubr.bf16.mxu0 %v1820
        %2015 = vmatmul.mubr.bf16.gmra.mrb[0].mxu0 %v1819
        %v2016 = vpop.f32.mrb[0].mxu0
        %v2017 = vadd.f32 %v1868, %v2016
        %v2018 = vpop.f32.mrb[0].mxu0
        %v2019 = vpop.f32.mrb[0].mxu0
        %v2020 = vadd.f32 %v1868, %v2019
        %v2021 = vpop.f32.mrb[0].mxu0
        %2022 = vmatprep.mubr.bf16.mxu0 %v1822
        %2023 = vmatmul.mubr.bf16.gmra.mrb[0].mxu0 %v1821
        %v2024 = vpop.f32.mrb[0].mxu0
        %v2025 = vadd.f32 %v1868, %v2024
        %v2026 = vpop.f32.mrb[0].mxu0
        %v2027 = vpop.f32.mrb[0].mxu0
        %v2028 = vadd.f32 %v1868, %v2027
        %v2029 = vpop.f32.mrb[0].mxu0
        %2030 = vmatprep.mubr.bf16.mxu0 %v1824
        %2031 = vmatmul.mubr.bf16.gmra.mrb[0].mxu0 %v1823
        %v2032 = vpop.f32.mrb[0].mxu0
        %v2033 = vadd.f32 %v1868, %v2032
        %v2034 = vpop.f32.mrb[0].mxu0
        %v2035 = vpop.f32.mrb[0].mxu0
        %v2036 = vadd.f32 %v1868, %v2035
        %v2037 = vpop.f32.mrb[0].mxu0
        %2038 = vmatprep.mubr.bf16.mxu0 %v1826
        %2039 = vmatmul.mubr.bf16.gmra.mrb[0].mxu0 %v1825
        %v2040 = vpop.f32.mrb[0].mxu0
        %v2041 = vadd.f32 %v1868, %v2040
        %v2042 = vpop.f32.mrb[0].mxu0
        %v2043 = vpop.f32.mrb[0].mxu0
        %v2044 = vadd.f32 %v1868, %v2043
        %v2045 = vpop.f32.mrb[0].mxu0
        %2046 = vmatprep.mubr.bf16.mxu0 %v1828
        %2047 = vmatmul.mubr.bf16.gmra.mrb[0].mxu0 %v1827
        %v2048 = vpop.f32.mrb[0].mxu0
        %v2049 = vadd.f32 %v1868, %v2048
        %v2050 = vpop.f32.mrb[0].mxu0
        %v2051 = vpop.f32.mrb[0].mxu0
        %v2052 = vadd.f32 %v1868, %v2051
        %v2053 = vpop.f32.mrb[0].mxu0
        %2054 = vmatprep.mubr.bf16.mxu0 %v1830
        %2055 = vmatmul.mubr.bf16.gmra.mrb[0].mxu0 %v1829
        %v2056 = vpop.f32.mrb[0].mxu0
        %v2057 = vadd.f32 %v1868, %v2056
        %v2058 = vpop.f32.mrb[0].mxu0
        %v2059 = vpop.f32.mrb[0].mxu0
        %v2060 = vadd.f32 %v1868, %v2059
        %v2061 = vpop.f32.mrb[0].mxu0
        %2062 = vdwg.mxu0
        %2063 = vst [vmem:[%s545] sm:$0xff] %v2001
        %2064 = vst [vmem:[%s545 + $0x8] sm:$0xff] %v2004
        %2065 = vst [vmem:[%s545 + $0x10] sm:$0xff] %v2009
        %2066 = vst [vmem:[%s545 + $0x18] sm:$0xff] %v2012
        %2067 = vst [vmem:[%s545 + $0x20] sm:$0xff] %v2017
        %2068 = vst [vmem:[%s545 + $0x28] sm:$0xff] %v2020
        %2069 = vst [vmem:[%s545 + $0x30] sm:$0xff] %v2025
        %2070 = vst [vmem:[%s545 + $0x38] sm:$0xff] %v2028
        %2071 = vst [vmem:[%s545 + $0x40] sm:$0xff] %v2033
        %2072 = vst [vmem:[%s545 + $0x48] sm:$0xff] %v2036
        %2073 = vst [vmem:[%s545 + $0x50] sm:$0xff] %v2041
        %2074 = vst [vmem:[%s545 + $0x58] sm:$0xff] %v2044
        %2075 = vst [vmem:[%s545 + $0x60] sm:$0xff] %v2049
        %2076 = vst [vmem:[%s545 + $0x68] sm:$0xff] %v2052
        %2077 = vst [vmem:[%s545 + $0x70] sm:$0xff] %v2057
        %2078 = vst [vmem:[%s545 + $0x78] sm:$0xff] %v2060
        %s2079 = sand.u32 %s319, 1
        %s2080 = scalar_lea.sflag [#allocation4], %s2079
        %s2081 = sand.u32 %s319, 1
        %s2082 = smul.addr %s2081, 128
        %s2083 = scalar_lea.vmem [#allocation14], %s2082
        // Predicated region
        $region101: #{tpu_custom_call.1} parent=71 // pred_check
          %p2084 = pneg %p329
        $region102: #{tpu_custom_call.1} parent=71 // pred_check_branch
          %2086 = sbr.rel (%p2084) target = $region104
        $region103: #{tpu_custom_call.1} parent=71 // pred_region
          %s2087 = smul.u32 16, %s33
          %s2089 = ssub.s32 2048, 2048
          %2090 = vsyncadd %s2080, %s2089
          %s2091 = smul.addr %s2087, 128
          %s2092 = scalar_lea.hbm %s13, %s2091
          %s2093 = sshll.u32 %s2083, 4
          %s2094 = int_to_ptr.vmem [resolvable:$true] %s2093
          %2099 = dma.vmem_to_hbm [thread:$0]  %s2094, 2048, %s2092, %s2080, 128, 128, 8
        $region104: #{tpu_custom_call.1} parent=71 // pred_fallthru
          _
      $region72: #{tpu_custom_call.1} parent=5 // pred_fallthru
        _
      %p2100 = scmp.le.s32.totalorder 2, %s28
      // Predicated region
      $region105: #{tpu_custom_call.1} parent=5 // pred_check
        %p2101 = pneg %p2100
      $region106: #{tpu_custom_call.1} parent=5 // pred_check_branch
        %2103 = sbr.rel (%p2101) target = $region108
      $region107: #{tpu_custom_call.1} parent=5 // pred_region
        %s2104 = ssub.s32 %s28, 2
        // Predicated region
        $region109: #{tpu_custom_call.1} parent=107 // pred_check
          %p2105 = pneg %p335
        $region110: #{tpu_custom_call.1} parent=107 // pred_check_branch
          %2107 = sbr.rel (%p2105) target = $region112
        $region111: #{tpu_custom_call.1} parent=107 // pred_region
          %s2108 = sand.u32 %s320, 1
          %s2109 = scalar_lea.sflag [#allocation4], %s2108
          %s2110 = sand.u32 %s320, 1
          %s2111 = smul.addr %s2110, 128
          %s2112 = scalar_lea.vmem [#allocation14], %s2111
          %2113 = dma.done %s2109, 2048
        $region112: #{tpu_custom_call.1} parent=107 // pred_fallthru
          _
      $region108: #{tpu_custom_call.1} parent=5 // pred_fallthru
        _
    $region6: #{tpu_custom_call.1} parent=1 // loop_footer
      %s32 = sadd.s32 1, %s28
    $region7: #{tpu_custom_call.1} parent=1 // loop_footer_branch
      %27 = sbr.rel target = $region3
    $region8: #{tpu_custom_call.1} parent=1 // loop_exit
      _
    %2114 = vsyncpa [#allocation3], 1
    %s2115 = scalar_lea.sflag [#allocation3], 1
    %2116 = vsyncpa %s2115, 1
    %2117 = vsyncpa [#allocation6], 1
    %2118 = vsyncpa [#allocation9], 1
    %2119 = vsyncpa [#allocation12], 1
    %2120 = vsyncpa [#allocation4], 1
    %s2121 = scalar_lea.sflag [#allocation4], 1
    %2122 = vsyncpa %s2121, 1

</llo_original>
